<compile_context>
chip_gen: v7x
topology: tpu7x:2x2x1
jax: 0.10.0
libtpu: 0.0.40
codegen_flags: <defaults>
</compile_context>

<pallas_src>
import math

import jax
import jax.numpy as jnp
from jax.experimental import pallas as pl
from jax.experimental.pallas import tpu as pltpu


# ----------------------------- Pallas kernel -------------------------------


def _make_seqconvs_kernel(H, W, C, L):
    """Fused kernel for one sample: L x (conv3x3 s=(2,1) + BN-bias + ReLU) + conv(4,1)."""

    def kernel(*refs):
        x_ref = refs[0]                       # (H+2, W+2, C) padded NHWC (or (H,W,C) if L==0)
        wb_refs = refs[1:1 + 2 * L]           # (w_flat (9C,C), bias (1,C)) per block
        wf_ref = refs[1 + 2 * L]              # (4C, C) final conv weights
        o_ref = refs[2 + 2 * L]               # (W, C) output tile
        scratch_refs = refs[3 + 2 * L:]       # padded VMEM scratch per intermediate layer

        def conv3x3_s2(src_ref, h_out, w_flat, bias):
            # src_ref holds the padded input (h_in+2, W+2, C); stride (2,1), pad 1.
            rows = []
            for ho in range(h_out):
                taps = []
                for i in range(3):
                    r = src_ref[2 * ho + i]                 # (W+2, C)
                    for j in range(3):
                        taps.append(r[j:j + W, :])          # (W, C)
                # taps folded into the contraction: (W, 9*C)
                rows.append(jnp.concatenate(taps, axis=-1))
            patches = jnp.concatenate(rows, axis=0)         # (h_out*W, 9*C)
            y = jnp.dot(patches, w_flat, preferred_element_type=jnp.float32)
            return jnp.maximum(y + bias, 0.0)               # (h_out*W, C)

        if L == 0:
            # No downsample blocks: the final conv consumes the (4, W, C) input directly.
            taps = [x_ref[h] for h in range(4)]
        else:
            src = x_ref
            h_cur = H
            y = None
            for t in range(L):
                h_out = h_cur // 2
                y = conv3x3_s2(src, h_out, wb_refs[2 * t][...], wb_refs[2 * t + 1][...])
                if t < L - 1:
                    # Stage into a zero-padded VMEM scratch so the next layer gets its halo.
                    scr = scratch_refs[t]
                    scr[...] = jnp.zeros_like(scr)
                    for ho in range(h_out):
                        scr[ho + 1, 1:1 + W, :] = y[ho * W:(ho + 1) * W, :]
                    src = scr
                h_cur = h_out
            # h_cur == 4 by construction (H = 2**(L+2)).
            taps = [y[h * W:(h + 1) * W, :] for h in range(h_cur)]

        # Final (4,1) conv: fold the 4 H-taps into the contraction -> (W, 4*C) @ (4*C, C).
        p_final = jnp.concatenate(taps, axis=-1)
        out = jnp.dot(p_final, wf_ref[...], preferred_element_type=jnp.float32)
        o_ref[...] = out.astype(o_ref.dtype)

    return kernel


# ------------------------------- Wrapper ------------------------------------


def seqconvs_forward(x_nchw, params):
    N, C, H, W = x_nchw.shape
    L = len(params["blocks"])

    x = jnp.transpose(x_nchw, (0, 2, 3, 1))           # NCHW -> NHWC
    if L == 0:
        xp = x
        x_spec = pl.BlockSpec((None, H, W, C), lambda n: (n, 0, 0, 0))
    else:
        xp = jnp.pad(x, ((0, 0), (1, 1), (1, 1), (0, 0)))   # pad once for the first conv
        x_spec = pl.BlockSpec((None, H + 2, W + 2, C), lambda n: (n, 0, 0, 0))

    in_specs = [x_spec]
    args = [xp]
    for blk in params["blocks"]:
        in_specs.append(pl.BlockSpec((9 * C, C), lambda n: (0, 0)))
        in_specs.append(pl.BlockSpec((1, C), lambda n: (0, 0)))
        args.extend([blk["w_flat"], blk["b"]])
    in_specs.append(pl.BlockSpec((4 * C, C), lambda n: (0, 0)))
    args.append(params["final_w_flat"])

    scratch = []
    h_cur = H
    for _ in range(max(L - 1, 0)):
        h_cur //= 2
        scratch.append(pltpu.VMEM((h_cur + 2, W + 2, C), jnp.float32))

    out = pl.pallas_call(
        _make_seqconvs_kernel(H, W, C, L),
        out_shape=jax.ShapeDtypeStruct((N, W, C), x_nchw.dtype),
        grid=(N,),
        in_specs=in_specs,
        out_specs=pl.BlockSpec((None, W, C), lambda n: (n, 0, 0)),
        scratch_shapes=scratch,
        compiler_params=pltpu.CompilerParams(dimension_semantics=("parallel",)),
    )(*args)

    # (N, W, C) -> (N, C, 1, W)
    return jnp.transpose(out, (0, 2, 1))[:, :, None, :]


# ------------------------------- Params --------------------------------------


def init_seqconvs_params(key, conv_dim, roi_size):
    height = roi_size[0]
    downsample_level = math.log2(height) - 2
    assert math.isclose(downsample_level, int(downsample_level))
    L = int(downsample_level)
    assert height == 2 ** (L + 2)

    eps = 1e-5
    blocks = []
    for _ in range(L):
        key, sub = jax.random.split(key)
        fan_in = conv_dim * 3 * 3
        bound = math.sqrt(3.0 / fan_in)  # kaiming_uniform(a=1), conv has no bias (BN)
        w_oihw = jax.random.uniform(
            sub, (conv_dim, conv_dim, 3, 3), jnp.float32, -bound, bound
        )
        w_hwio = jnp.transpose(w_oihw, (2, 3, 1, 0))          # (kh, kw, Cin, Cout)
        # BatchNorm2d (eval mode) with fresh-init stats: gamma=1, beta=0, mean=0, var=1.
        gamma = jnp.ones((conv_dim,), jnp.float32)
        beta = jnp.zeros((conv_dim,), jnp.float32)
        r_mean = jnp.zeros((conv_dim,), jnp.float32)
        r_var = jnp.ones((conv_dim,), jnp.float32)
        scale = gamma / jnp.sqrt(r_var + eps)
        bias = beta - r_mean * scale
        # Fold the BN scale into the conv weights (exact: conv has no bias).
        w_flat = (w_hwio * scale[None, None, None, :]).reshape(9 * conv_dim, conv_dim)
        blocks.append(
            dict(
                w_hwio=w_hwio,             # unfolded, for the reference
                scale=scale,               # (C,), for the reference
                bias=bias,                 # (C,), for the reference
                w_flat=w_flat,             # (9C, C), BN-folded, for the kernel
                b=bias.reshape(1, conv_dim),
            )
        )

    key, sub = jax.random.split(key)
    fan_in = conv_dim * 4 * 1
    bound = math.sqrt(1.0 / fan_in)  # default Conv2d kaiming_uniform(a=sqrt(5))
    wf_oihw = jax.random.uniform(
        sub, (conv_dim, conv_dim, 4, 1), jnp.float32, -bound, bound
    )
    wf_hwio = jnp.transpose(wf_oihw, (2, 3, 1, 0))
    return dict(
        blocks=blocks,
        final_w_hwio=wf_hwio,
        final_w_flat=wf_hwio.reshape(4 * conv_dim, conv_dim),
    )


# ------------------------------ Reference -------------------------------------


def seqconvs_reference(x_nchw, params):
    """Pure-JAX reference using lax.conv_general_dilated (BN unfused) for verification."""
    x = jnp.transpose(x_nchw, (0, 2, 3, 1))
    dn = ("NHWC", "HWIO", "NHWC")
    for blk in params["blocks"]:
        x = jax.lax.conv_general_dilated(
            x, blk["w_hwio"], (2, 1), ((1, 1), (1, 1)),
            dimension_numbers=dn, precision=jax.lax.Precision.HIGHEST,
        )
        x = x * blk["scale"] + blk["bias"]
        x = jnp.maximum(x, 0.0)
    x = jax.lax.conv_general_dilated(
        x, params["final_w_hwio"], (1, 1), ((0, 0), (0, 0)),
        dimension_numbers=dn, precision=jax.lax.Precision.HIGHEST,
    )
    return jnp.transpose(x, (0, 3, 1, 2))


if __name__ == "__main__":
    conv_dim = 16
    roi_size = (16, 16)  # height=16 -> 2 downsample blocks + final (4,1) conv
    batch = 2

    key = jax.random.PRNGKey(0)
    key, xkey = jax.random.split(key)
    x = jax.random.normal(
        xkey, (batch, conv_dim, roi_size[0], roi_size[1]), jnp.float32
    )  # NCHW, matching the PyTorch module
    params = init_seqconvs_params(key, conv_dim, roi_size)

    out = jax.block_until_ready(jax.jit(seqconvs_forward)(x, params))
    ref = jax.block_until_ready(seqconvs_reference(x, params))

    assert out.shape == (batch, conv_dim, 1, roi_size[1]), out.shape
    max_err = float(jnp.max(jnp.abs(out - ref)))
    assert jnp.allclose(out, ref, atol=1e-2, rtol=1e-2), max_err
    print("KERNEL_OK")
</pallas_src>

<mosaic_0001>
module attributes {stable_mosaic.version = 11 : i64} {
  func.func @kernel(%arg0: i32, %arg1: memref<1x18x18x16xf32, #tpu.memory_space<vmem>>, %arg2: memref<144x16xf32, #tpu.memory_space<vmem>>, %arg3: memref<1x16xf32, #tpu.memory_space<vmem>>, %arg4: memref<144x16xf32, #tpu.memory_space<vmem>>, %arg5: memref<1x16xf32, #tpu.memory_space<vmem>>, %arg6: memref<64x16xf32, #tpu.memory_space<vmem>>, %arg7: memref<1x16x16xf32, #tpu.memory_space<vmem>>, %arg8: memref<10x18x16xf32, #tpu.memory_space<vmem>>) attributes {dimension_semantics = [#tpu.dimension_semantics<parallel>], iteration_bounds = array<i64: 2>, scalar_prefetch = 0 : i64, scratch_operands = 1 : i64, tpu.core_type = #tpu.core_type<tc>, window_params = [{transform_indices = @transform_0, window_bounds = array<i64: 1, 18, 18, 16>}, {pipeline_mode = #tpu.pipeline_mode<synchronous>, transform_indices = @transform_1, window_bounds = array<i64: 144, 16>}, {pipeline_mode = #tpu.pipeline_mode<synchronous>, transform_indices = @transform_2, window_bounds = array<i64: 1, 16>}, {pipeline_mode = #tpu.pipeline_mode<synchronous>, transform_indices = @transform_3, window_bounds = array<i64: 144, 16>}, {pipeline_mode = #tpu.pipeline_mode<synchronous>, transform_indices = @transform_4, window_bounds = array<i64: 1, 16>}, {pipeline_mode = #tpu.pipeline_mode<synchronous>, transform_indices = @transform_5, window_bounds = array<i64: 64, 16>}, {transform_indices = @transform_6, window_bounds = array<i64: 1, 16, 16>}]} {
    %c0 = arith.constant 0 : index
    %c0_0 = arith.constant 0 : index
    %0 = vector.load %arg2[%c0, %c0_0] : memref<144x16xf32, #tpu.memory_space<vmem>>, vector<144x16xf32>
    %c0_1 = arith.constant 0 : index
    %c0_2 = arith.constant 0 : index
    %1 = vector.load %arg3[%c0_1, %c0_2] : memref<1x16xf32, #tpu.memory_space<vmem>>, vector<1x16xf32>
    %c0_3 = arith.constant 0 : index
    %c0_4 = arith.constant 0 : index
    %c0_5 = arith.constant 0 : index
    %c0_6 = arith.constant 0 : index
    %2 = vector.load %arg1[%c0_3, %c0_4, %c0_5, %c0_6] : memref<1x18x18x16xf32, #tpu.memory_space<vmem>>, vector<1x1x18x16xf32>
    %3 = vector.shape_cast %2 : vector<1x1x18x16xf32> to vector<18x16xf32>
    %4 = vector.extract_strided_slice %3 {offsets = [0, 0], sizes = [16, 16], strides = [1, 1]} : vector<18x16xf32> to vector<16x16xf32>
    %5 = vector.extract_strided_slice %3 {offsets = [1, 0], sizes = [16, 16], strides = [1, 1]} : vector<18x16xf32> to vector<16x16xf32>
    %6 = vector.extract_strided_slice %3 {offsets = [2, 0], sizes = [16, 16], strides = [1, 1]} : vector<18x16xf32> to vector<16x16xf32>
    %c0_7 = arith.constant 0 : index
    %c1 = arith.constant 1 : index
    %c0_8 = arith.constant 0 : index
    %c0_9 = arith.constant 0 : index
    %7 = vector.load %arg1[%c0_7, %c1, %c0_8, %c0_9] : memref<1x18x18x16xf32, #tpu.memory_space<vmem>>, vector<1x1x18x16xf32>
    %8 = vector.shape_cast %7 : vector<1x1x18x16xf32> to vector<18x16xf32>
    %9 = vector.extract_strided_slice %8 {offsets = [0, 0], sizes = [16, 16], strides = [1, 1]} : vector<18x16xf32> to vector<16x16xf32>
    %10 = vector.extract_strided_slice %8 {offsets = [1, 0], sizes = [16, 16], strides = [1, 1]} : vector<18x16xf32> to vector<16x16xf32>
    %11 = vector.extract_strided_slice %8 {offsets = [2, 0], sizes = [16, 16], strides = [1, 1]} : vector<18x16xf32> to vector<16x16xf32>
    %c0_10 = arith.constant 0 : index
    %c2 = arith.constant 2 : index
    %c0_11 = arith.constant 0 : index
    %c0_12 = arith.constant 0 : index
    %12 = vector.load %arg1[%c0_10, %c2, %c0_11, %c0_12] : memref<1x18x18x16xf32, #tpu.memory_space<vmem>>, vector<1x1x18x16xf32>
    %13 = vector.shape_cast %12 : vector<1x1x18x16xf32> to vector<18x16xf32>
    %14 = vector.extract_strided_slice %13 {offsets = [0, 0], sizes = [16, 16], strides = [1, 1]} : vector<18x16xf32> to vector<16x16xf32>
    %15 = vector.extract_strided_slice %13 {offsets = [1, 0], sizes = [16, 16], strides = [1, 1]} : vector<18x16xf32> to vector<16x16xf32>
    %16 = vector.extract_strided_slice %13 {offsets = [2, 0], sizes = [16, 16], strides = [1, 1]} : vector<18x16xf32> to vector<16x16xf32>
    %17 = tpu.concatenate %4, %5, %6, %9, %10, %11, %14, %15, %16 in 1 : vector<16x16xf32>, vector<16x16xf32>, vector<16x16xf32>, vector<16x16xf32>, vector<16x16xf32>, vector<16x16xf32>, vector<16x16xf32>, vector<16x16xf32>, vector<16x16xf32> -> vector<16x144xf32>
    %c0_13 = arith.constant 0 : index
    %c2_14 = arith.constant 2 : index
    %c0_15 = arith.constant 0 : index
    %c0_16 = arith.constant 0 : index
    %18 = vector.load %arg1[%c0_13, %c2_14, %c0_15, %c0_16] : memref<1x18x18x16xf32, #tpu.memory_space<vmem>>, vector<1x1x18x16xf32>
    %19 = vector.shape_cast %18 : vector<1x1x18x16xf32> to vector<18x16xf32>
    %20 = vector.extract_strided_slice %19 {offsets = [0, 0], sizes = [16, 16], strides = [1, 1]} : vector<18x16xf32> to vector<16x16xf32>
    %21 = vector.extract_strided_slice %19 {offsets = [1, 0], sizes = [16, 16], strides = [1, 1]} : vector<18x16xf32> to vector<16x16xf32>
    %22 = vector.extract_strided_slice %19 {offsets = [2, 0], sizes = [16, 16], strides = [1, 1]} : vector<18x16xf32> to vector<16x16xf32>
    %c0_17 = arith.constant 0 : index
    %c3 = arith.constant 3 : index
    %c0_18 = arith.constant 0 : index
    %c0_19 = arith.constant 0 : index
    %23 = vector.load %arg1[%c0_17, %c3, %c0_18, %c0_19] : memref<1x18x18x16xf32, #tpu.memory_space<vmem>>, vector<1x1x18x16xf32>
    %24 = vector.shape_cast %23 : vector<1x1x18x16xf32> to vector<18x16xf32>
    %25 = vector.extract_strided_slice %24 {offsets = [0, 0], sizes = [16, 16], strides = [1, 1]} : vector<18x16xf32> to vector<16x16xf32>
    %26 = vector.extract_strided_slice %24 {offsets = [1, 0], sizes = [16, 16], strides = [1, 1]} : vector<18x16xf32> to vector<16x16xf32>
    %27 = vector.extract_strided_slice %24 {offsets = [2, 0], sizes = [16, 16], strides = [1, 1]} : vector<18x16xf32> to vector<16x16xf32>
    %c0_20 = arith.constant 0 : index
    %c4 = arith.constant 4 : index
    %c0_21 = arith.constant 0 : index
    %c0_22 = arith.constant 0 : index
    %28 = vector.load %arg1[%c0_20, %c4, %c0_21, %c0_22] : memref<1x18x18x16xf32, #tpu.memory_space<vmem>>, vector<1x1x18x16xf32>
    %29 = vector.shape_cast %28 : vector<1x1x18x16xf32> to vector<18x16xf32>
    %30 = vector.extract_strided_slice %29 {offsets = [0, 0], sizes = [16, 16], strides = [1, 1]} : vector<18x16xf32> to vector<16x16xf32>
    %31 = vector.extract_strided_slice %29 {offsets = [1, 0], sizes = [16, 16], strides = [1, 1]} : vector<18x16xf32> to vector<16x16xf32>
    %32 = vector.extract_strided_slice %29 {offsets = [2, 0], sizes = [16, 16], strides = [1, 1]} : vector<18x16xf32> to vector<16x16xf32>
    %33 = tpu.concatenate %20, %21, %22, %25, %26, %27, %30, %31, %32 in 1 : vector<16x16xf32>, vector<16x16xf32>, vector<16x16xf32>, vector<16x16xf32>, vector<16x16xf32>, vector<16x16xf32>, vector<16x16xf32>, vector<16x16xf32>, vector<16x16xf32> -> vector<16x144xf32>
    %c0_23 = arith.constant 0 : index
    %c4_24 = arith.constant 4 : index
    %c0_25 = arith.constant 0 : index
    %c0_26 = arith.constant 0 : index
    %34 = vector.load %arg1[%c0_23, %c4_24, %c0_25, %c0_26] : memref<1x18x18x16xf32, #tpu.memory_space<vmem>>, vector<1x1x18x16xf32>
    %35 = vector.shape_cast %34 : vector<1x1x18x16xf32> to vector<18x16xf32>
    %36 = vector.extract_strided_slice %35 {offsets = [0, 0], sizes = [16, 16], strides = [1, 1]} : vector<18x16xf32> to vector<16x16xf32>
    %37 = vector.extract_strided_slice %35 {offsets = [1, 0], sizes = [16, 16], strides = [1, 1]} : vector<18x16xf32> to vector<16x16xf32>
    %38 = vector.extract_strided_slice %35 {offsets = [2, 0], sizes = [16, 16], strides = [1, 1]} : vector<18x16xf32> to vector<16x16xf32>
    %c0_27 = arith.constant 0 : index
    %c5 = arith.constant 5 : index
    %c0_28 = arith.constant 0 : index
    %c0_29 = arith.constant 0 : index
    %39 = vector.load %arg1[%c0_27, %c5, %c0_28, %c0_29] : memref<1x18x18x16xf32, #tpu.memory_space<vmem>>, vector<1x1x18x16xf32>
    %40 = vector.shape_cast %39 : vector<1x1x18x16xf32> to vector<18x16xf32>
    %41 = vector.extract_strided_slice %40 {offsets = [0, 0], sizes = [16, 16], strides = [1, 1]} : vector<18x16xf32> to vector<16x16xf32>
    %42 = vector.extract_strided_slice %40 {offsets = [1, 0], sizes = [16, 16], strides = [1, 1]} : vector<18x16xf32> to vector<16x16xf32>
    %43 = vector.extract_strided_slice %40 {offsets = [2, 0], sizes = [16, 16], strides = [1, 1]} : vector<18x16xf32> to vector<16x16xf32>
    %c0_30 = arith.constant 0 : index
    %c6 = arith.constant 6 : index
    %c0_31 = arith.constant 0 : index
    %c0_32 = arith.constant 0 : index
    %44 = vector.load %arg1[%c0_30, %c6, %c0_31, %c0_32] : memref<1x18x18x16xf32, #tpu.memory_space<vmem>>, vector<1x1x18x16xf32>
    %45 = vector.shape_cast %44 : vector<1x1x18x16xf32> to vector<18x16xf32>
    %46 = vector.extract_strided_slice %45 {offsets = [0, 0], sizes = [16, 16], strides = [1, 1]} : vector<18x16xf32> to vector<16x16xf32>
    %47 = vector.extract_strided_slice %45 {offsets = [1, 0], sizes = [16, 16], strides = [1, 1]} : vector<18x16xf32> to vector<16x16xf32>
    %48 = vector.extract_strided_slice %45 {offsets = [2, 0], sizes = [16, 16], strides = [1, 1]} : vector<18x16xf32> to vector<16x16xf32>
    %49 = tpu.concatenate %36, %37, %38, %41, %42, %43, %46, %47, %48 in 1 : vector<16x16xf32>, vector<16x16xf32>, vector<16x16xf32>, vector<16x16xf32>, vector<16x16xf32>, vector<16x16xf32>, vector<16x16xf32>, vector<16x16xf32>, vector<16x16xf32> -> vector<16x144xf32>
    %c0_33 = arith.constant 0 : index
    %c6_34 = arith.constant 6 : index
    %c0_35 = arith.constant 0 : index
    %c0_36 = arith.constant 0 : index
    %50 = vector.load %arg1[%c0_33, %c6_34, %c0_35, %c0_36] : memref<1x18x18x16xf32, #tpu.memory_space<vmem>>, vector<1x1x18x16xf32>
    %51 = vector.shape_cast %50 : vector<1x1x18x16xf32> to vector<18x16xf32>
    %52 = vector.extract_strided_slice %51 {offsets = [0, 0], sizes = [16, 16], strides = [1, 1]} : vector<18x16xf32> to vector<16x16xf32>
    %53 = vector.extract_strided_slice %51 {offsets = [1, 0], sizes = [16, 16], strides = [1, 1]} : vector<18x16xf32> to vector<16x16xf32>
    %54 = vector.extract_strided_slice %51 {offsets = [2, 0], sizes = [16, 16], strides = [1, 1]} : vector<18x16xf32> to vector<16x16xf32>
    %c0_37 = arith.constant 0 : index
    %c7 = arith.constant 7 : index
    %c0_38 = arith.constant 0 : index
    %c0_39 = arith.constant 0 : index
    %55 = vector.load %arg1[%c0_37, %c7, %c0_38, %c0_39] : memref<1x18x18x16xf32, #tpu.memory_space<vmem>>, vector<1x1x18x16xf32>
    %56 = vector.shape_cast %55 : vector<1x1x18x16xf32> to vector<18x16xf32>
    %57 = vector.extract_strided_slice %56 {offsets = [0, 0], sizes = [16, 16], strides = [1, 1]} : vector<18x16xf32> to vector<16x16xf32>
    %58 = vector.extract_strided_slice %56 {offsets = [1, 0], sizes = [16, 16], strides = [1, 1]} : vector<18x16xf32> to vector<16x16xf32>
    %59 = vector.extract_strided_slice %56 {offsets = [2, 0], sizes = [16, 16], strides = [1, 1]} : vector<18x16xf32> to vector<16x16xf32>
    %c0_40 = arith.constant 0 : index
    %c8 = arith.constant 8 : index
    %c0_41 = arith.constant 0 : index
    %c0_42 = arith.constant 0 : index
    %60 = vector.load %arg1[%c0_40, %c8, %c0_41, %c0_42] : memref<1x18x18x16xf32, #tpu.memory_space<vmem>>, vector<1x1x18x16xf32>
    %61 = vector.shape_cast %60 : vector<1x1x18x16xf32> to vector<18x16xf32>
    %62 = vector.extract_strided_slice %61 {offsets = [0, 0], sizes = [16, 16], strides = [1, 1]} : vector<18x16xf32> to vector<16x16xf32>
    %63 = vector.extract_strided_slice %61 {offsets = [1, 0], sizes = [16, 16], strides = [1, 1]} : vector<18x16xf32> to vector<16x16xf32>
    %64 = vector.extract_strided_slice %61 {offsets = [2, 0], sizes = [16, 16], strides = [1, 1]} : vector<18x16xf32> to vector<16x16xf32>
    %65 = tpu.concatenate %52, %53, %54, %57, %58, %59, %62, %63, %64 in 1 : vector<16x16xf32>, vector<16x16xf32>, vector<16x16xf32>, vector<16x16xf32>, vector<16x16xf32>, vector<16x16xf32>, vector<16x16xf32>, vector<16x16xf32>, vector<16x16xf32> -> vector<16x144xf32>
    %c0_43 = arith.constant 0 : index
    %c8_44 = arith.constant 8 : index
    %c0_45 = arith.constant 0 : index
    %c0_46 = arith.constant 0 : index
    %66 = vector.load %arg1[%c0_43, %c8_44, %c0_45, %c0_46] : memref<1x18x18x16xf32, #tpu.memory_space<vmem>>, vector<1x1x18x16xf32>
    %67 = vector.shape_cast %66 : vector<1x1x18x16xf32> to vector<18x16xf32>
    %68 = vector.extract_strided_slice %67 {offsets = [0, 0], sizes = [16, 16], strides = [1, 1]} : vector<18x16xf32> to vector<16x16xf32>
    %69 = vector.extract_strided_slice %67 {offsets = [1, 0], sizes = [16, 16], strides = [1, 1]} : vector<18x16xf32> to vector<16x16xf32>
    %70 = vector.extract_strided_slice %67 {offsets = [2, 0], sizes = [16, 16], strides = [1, 1]} : vector<18x16xf32> to vector<16x16xf32>
    %c0_47 = arith.constant 0 : index
    %c9 = arith.constant 9 : index
    %c0_48 = arith.constant 0 : index
    %c0_49 = arith.constant 0 : index
    %71 = vector.load %arg1[%c0_47, %c9, %c0_48, %c0_49] : memref<1x18x18x16xf32, #tpu.memory_space<vmem>>, vector<1x1x18x16xf32>
    %72 = vector.shape_cast %71 : vector<1x1x18x16xf32> to vector<18x16xf32>
    %73 = vector.extract_strided_slice %72 {offsets = [0, 0], sizes = [16, 16], strides = [1, 1]} : vector<18x16xf32> to vector<16x16xf32>
    %74 = vector.extract_strided_slice %72 {offsets = [1, 0], sizes = [16, 16], strides = [1, 1]} : vector<18x16xf32> to vector<16x16xf32>
    %75 = vector.extract_strided_slice %72 {offsets = [2, 0], sizes = [16, 16], strides = [1, 1]} : vector<18x16xf32> to vector<16x16xf32>
    %c0_50 = arith.constant 0 : index
    %c10 = arith.constant 10 : index
    %c0_51 = arith.constant 0 : index
    %c0_52 = arith.constant 0 : index
    %76 = vector.load %arg1[%c0_50, %c10, %c0_51, %c0_52] : memref<1x18x18x16xf32, #tpu.memory_space<vmem>>, vector<1x1x18x16xf32>
    %77 = vector.shape_cast %76 : vector<1x1x18x16xf32> to vector<18x16xf32>
    %78 = vector.extract_strided_slice %77 {offsets = [0, 0], sizes = [16, 16], strides = [1, 1]} : vector<18x16xf32> to vector<16x16xf32>
    %79 = vector.extract_strided_slice %77 {offsets = [1, 0], sizes = [16, 16], strides = [1, 1]} : vector<18x16xf32> to vector<16x16xf32>
    %80 = vector.extract_strided_slice %77 {offsets = [2, 0], sizes = [16, 16], strides = [1, 1]} : vector<18x16xf32> to vector<16x16xf32>
    %81 = tpu.concatenate %68, %69, %70, %73, %74, %75, %78, %79, %80 in 1 : vector<16x16xf32>, vector<16x16xf32>, vector<16x16xf32>, vector<16x16xf32>, vector<16x16xf32>, vector<16x16xf32>, vector<16x16xf32>, vector<16x16xf32>, vector<16x16xf32> -> vector<16x144xf32>
    %c0_53 = arith.constant 0 : index
    %c10_54 = arith.constant 10 : index
    %c0_55 = arith.constant 0 : index
    %c0_56 = arith.constant 0 : index
    %82 = vector.load %arg1[%c0_53, %c10_54, %c0_55, %c0_56] : memref<1x18x18x16xf32, #tpu.memory_space<vmem>>, vector<1x1x18x16xf32>
    %83 = vector.shape_cast %82 : vector<1x1x18x16xf32> to vector<18x16xf32>
    %84 = vector.extract_strided_slice %83 {offsets = [0, 0], sizes = [16, 16], strides = [1, 1]} : vector<18x16xf32> to vector<16x16xf32>
    %85 = vector.extract_strided_slice %83 {offsets = [1, 0], sizes = [16, 16], strides = [1, 1]} : vector<18x16xf32> to vector<16x16xf32>
    %86 = vector.extract_strided_slice %83 {offsets = [2, 0], sizes = [16, 16], strides = [1, 1]} : vector<18x16xf32> to vector<16x16xf32>
    %c0_57 = arith.constant 0 : index
    %c11 = arith.constant 11 : index
    %c0_58 = arith.constant 0 : index
    %c0_59 = arith.constant 0 : index
    %87 = vector.load %arg1[%c0_57, %c11, %c0_58, %c0_59] : memref<1x18x18x16xf32, #tpu.memory_space<vmem>>, vector<1x1x18x16xf32>
    %88 = vector.shape_cast %87 : vector<1x1x18x16xf32> to vector<18x16xf32>
    %89 = vector.extract_strided_slice %88 {offsets = [0, 0], sizes = [16, 16], strides = [1, 1]} : vector<18x16xf32> to vector<16x16xf32>
    %90 = vector.extract_strided_slice %88 {offsets = [1, 0], sizes = [16, 16], strides = [1, 1]} : vector<18x16xf32> to vector<16x16xf32>
    %91 = vector.extract_strided_slice %88 {offsets = [2, 0], sizes = [16, 16], strides = [1, 1]} : vector<18x16xf32> to vector<16x16xf32>
    %c0_60 = arith.constant 0 : index
    %c12 = arith.constant 12 : index
    %c0_61 = arith.constant 0 : index
    %c0_62 = arith.constant 0 : index
    %92 = vector.load %arg1[%c0_60, %c12, %c0_61, %c0_62] : memref<1x18x18x16xf32, #tpu.memory_space<vmem>>, vector<1x1x18x16xf32>
    %93 = vector.shape_cast %92 : vector<1x1x18x16xf32> to vector<18x16xf32>
    %94 = vector.extract_strided_slice %93 {offsets = [0, 0], sizes = [16, 16], strides = [1, 1]} : vector<18x16xf32> to vector<16x16xf32>
    %95 = vector.extract_strided_slice %93 {offsets = [1, 0], sizes = [16, 16], strides = [1, 1]} : vector<18x16xf32> to vector<16x16xf32>
    %96 = vector.extract_strided_slice %93 {offsets = [2, 0], sizes = [16, 16], strides = [1, 1]} : vector<18x16xf32> to vector<16x16xf32>
    %97 = tpu.concatenate %84, %85, %86, %89, %90, %91, %94, %95, %96 in 1 : vector<16x16xf32>, vector<16x16xf32>, vector<16x16xf32>, vector<16x16xf32>, vector<16x16xf32>, vector<16x16xf32>, vector<16x16xf32>, vector<16x16xf32>, vector<16x16xf32> -> vector<16x144xf32>
    %c0_63 = arith.constant 0 : index
    %c12_64 = arith.constant 12 : index
    %c0_65 = arith.constant 0 : index
    %c0_66 = arith.constant 0 : index
    %98 = vector.load %arg1[%c0_63, %c12_64, %c0_65, %c0_66] : memref<1x18x18x16xf32, #tpu.memory_space<vmem>>, vector<1x1x18x16xf32>
    %99 = vector.shape_cast %98 : vector<1x1x18x16xf32> to vector<18x16xf32>
    %100 = vector.extract_strided_slice %99 {offsets = [0, 0], sizes = [16, 16], strides = [1, 1]} : vector<18x16xf32> to vector<16x16xf32>
    %101 = vector.extract_strided_slice %99 {offsets = [1, 0], sizes = [16, 16], strides = [1, 1]} : vector<18x16xf32> to vector<16x16xf32>
    %102 = vector.extract_strided_slice %99 {offsets = [2, 0], sizes = [16, 16], strides = [1, 1]} : vector<18x16xf32> to vector<16x16xf32>
    %c0_67 = arith.constant 0 : index
    %c13 = arith.constant 13 : index
    %c0_68 = arith.constant 0 : index
    %c0_69 = arith.constant 0 : index
    %103 = vector.load %arg1[%c0_67, %c13, %c0_68, %c0_69] : memref<1x18x18x16xf32, #tpu.memory_space<vmem>>, vector<1x1x18x16xf32>
    %104 = vector.shape_cast %103 : vector<1x1x18x16xf32> to vector<18x16xf32>
    %105 = vector.extract_strided_slice %104 {offsets = [0, 0], sizes = [16, 16], strides = [1, 1]} : vector<18x16xf32> to vector<16x16xf32>
    %106 = vector.extract_strided_slice %104 {offsets = [1, 0], sizes = [16, 16], strides = [1, 1]} : vector<18x16xf32> to vector<16x16xf32>
    %107 = vector.extract_strided_slice %104 {offsets = [2, 0], sizes = [16, 16], strides = [1, 1]} : vector<18x16xf32> to vector<16x16xf32>
    %c0_70 = arith.constant 0 : index
    %c14 = arith.constant 14 : index
    %c0_71 = arith.constant 0 : index
    %c0_72 = arith.constant 0 : index
    %108 = vector.load %arg1[%c0_70, %c14, %c0_71, %c0_72] : memref<1x18x18x16xf32, #tpu.memory_space<vmem>>, vector<1x1x18x16xf32>
    %109 = vector.shape_cast %108 : vector<1x1x18x16xf32> to vector<18x16xf32>
    %110 = vector.extract_strided_slice %109 {offsets = [0, 0], sizes = [16, 16], strides = [1, 1]} : vector<18x16xf32> to vector<16x16xf32>
    %111 = vector.extract_strided_slice %109 {offsets = [1, 0], sizes = [16, 16], strides = [1, 1]} : vector<18x16xf32> to vector<16x16xf32>
    %112 = vector.extract_strided_slice %109 {offsets = [2, 0], sizes = [16, 16], strides = [1, 1]} : vector<18x16xf32> to vector<16x16xf32>
    %113 = tpu.concatenate %100, %101, %102, %105, %106, %107, %110, %111, %112 in 1 : vector<16x16xf32>, vector<16x16xf32>, vector<16x16xf32>, vector<16x16xf32>, vector<16x16xf32>, vector<16x16xf32>, vector<16x16xf32>, vector<16x16xf32>, vector<16x16xf32> -> vector<16x144xf32>
    %c0_73 = arith.constant 0 : index
    %c14_74 = arith.constant 14 : index
    %c0_75 = arith.constant 0 : index
    %c0_76 = arith.constant 0 : index
    %114 = vector.load %arg1[%c0_73, %c14_74, %c0_75, %c0_76] : memref<1x18x18x16xf32, #tpu.memory_space<vmem>>, vector<1x1x18x16xf32>
    %115 = vector.shape_cast %114 : vector<1x1x18x16xf32> to vector<18x16xf32>
    %116 = vector.extract_strided_slice %115 {offsets = [0, 0], sizes = [16, 16], strides = [1, 1]} : vector<18x16xf32> to vector<16x16xf32>
    %117 = vector.extract_strided_slice %115 {offsets = [1, 0], sizes = [16, 16], strides = [1, 1]} : vector<18x16xf32> to vector<16x16xf32>
    %118 = vector.extract_strided_slice %115 {offsets = [2, 0], sizes = [16, 16], strides = [1, 1]} : vector<18x16xf32> to vector<16x16xf32>
    %c0_77 = arith.constant 0 : index
    %c15 = arith.constant 15 : index
    %c0_78 = arith.constant 0 : index
    %c0_79 = arith.constant 0 : index
    %119 = vector.load %arg1[%c0_77, %c15, %c0_78, %c0_79] : memref<1x18x18x16xf32, #tpu.memory_space<vmem>>, vector<1x1x18x16xf32>
    %120 = vector.shape_cast %119 : vector<1x1x18x16xf32> to vector<18x16xf32>
    %121 = vector.extract_strided_slice %120 {offsets = [0, 0], sizes = [16, 16], strides = [1, 1]} : vector<18x16xf32> to vector<16x16xf32>
    %122 = vector.extract_strided_slice %120 {offsets = [1, 0], sizes = [16, 16], strides = [1, 1]} : vector<18x16xf32> to vector<16x16xf32>
    %123 = vector.extract_strided_slice %120 {offsets = [2, 0], sizes = [16, 16], strides = [1, 1]} : vector<18x16xf32> to vector<16x16xf32>
    %c0_80 = arith.constant 0 : index
    %c16 = arith.constant 16 : index
    %c0_81 = arith.constant 0 : index
    %c0_82 = arith.constant 0 : index
    %124 = vector.load %arg1[%c0_80, %c16, %c0_81, %c0_82] : memref<1x18x18x16xf32, #tpu.memory_space<vmem>>, vector<1x1x18x16xf32>
    %125 = vector.shape_cast %124 : vector<1x1x18x16xf32> to vector<18x16xf32>
    %126 = vector.extract_strided_slice %125 {offsets = [0, 0], sizes = [16, 16], strides = [1, 1]} : vector<18x16xf32> to vector<16x16xf32>
    %127 = vector.extract_strided_slice %125 {offsets = [1, 0], sizes = [16, 16], strides = [1, 1]} : vector<18x16xf32> to vector<16x16xf32>
    %128 = vector.extract_strided_slice %125 {offsets = [2, 0], sizes = [16, 16], strides = [1, 1]} : vector<18x16xf32> to vector<16x16xf32>
    %129 = tpu.concatenate %116, %117, %118, %121, %122, %123, %126, %127, %128 in 1 : vector<16x16xf32>, vector<16x16xf32>, vector<16x16xf32>, vector<16x16xf32>, vector<16x16xf32>, vector<16x16xf32>, vector<16x16xf32>, vector<16x16xf32>, vector<16x16xf32> -> vector<16x144xf32>
    %130 = tpu.concatenate %17, %33, %49, %65, %81, %97, %113, %129 in 0 : vector<16x144xf32>, vector<16x144xf32>, vector<16x144xf32>, vector<16x144xf32>, vector<16x144xf32>, vector<16x144xf32>, vector<16x144xf32>, vector<16x144xf32> -> vector<128x144xf32>
    %cst = arith.constant dense<0.000000e+00> : vector<128x16xf32>
    %131 = tpu.matmul %130, %0, %cst {dimension_numbers = #tpu.dot_dimension_numbers<[1], [0], [0], [1], [0, 0, 1, 1], [], []>} : vector<128x144xf32>, vector<144x16xf32>, vector<128x16xf32> -> vector<128x16xf32>
    %132 = vector.broadcast %1 : vector<1x16xf32> to vector<128x16xf32>
    %133 = arith.addf %131, %132 : vector<128x16xf32>
    %cst_83 = arith.constant 0.000000e+00 : f32
    %134 = vector.broadcast %cst_83 : f32 to vector<128x16xf32>
    %135 = arith.maximumf %133, %134 : vector<128x16xf32>
    %cst_84 = arith.constant 0.000000e+00 : f32
    %136 = vector.broadcast %cst_84 : f32 to vector<10x18x16xf32>
    %c0_85 = arith.constant 0 : index
    %c0_86 = arith.constant 0 : index
    %c0_87 = arith.constant 0 : index
    %137 = vector.load %arg8[%c0_85, %c0_86, %c0_87] : memref<10x18x16xf32, #tpu.memory_space<vmem>>, vector<10x18x16xf32>
    tpu.vector_store %arg8[%c0_85, %c0_86, %c0_87], %136 {strides = array<i32>} : memref<10x18x16xf32, #tpu.memory_space<vmem>>, vector<10x18x16xf32>,
    %138 = vector.extract_strided_slice %135 {offsets = [0, 0], sizes = [16, 16], strides = [1, 1]} : vector<128x16xf32> to vector<16x16xf32>
    %c1_88 = arith.constant 1 : index
    %c1_89 = arith.constant 1 : index
    %c0_90 = arith.constant 0 : index
    %139 = vector.load %arg8[%c1_88, %c1_89, %c0_90] : memref<10x18x16xf32, #tpu.memory_space<vmem>>, vector<1x16x16xf32>
    %140 = vector.shape_cast %139 : vector<1x16x16xf32> to vector<16x16xf32>
    %141 = vector.shape_cast %138 : vector<16x16xf32> to vector<1x16x16xf32>
    tpu.vector_store %arg8[%c1_88, %c1_89, %c0_90], %141 {strides = array<i32>} : memref<10x18x16xf32, #tpu.memory_space<vmem>>, vector<1x16x16xf32>,
    %142 = vector.extract_strided_slice %135 {offsets = [16, 0], sizes = [16, 16], strides = [1, 1]} : vector<128x16xf32> to vector<16x16xf32>
    %c2_91 = arith.constant 2 : index
    %c1_92 = arith.constant 1 : index
    %c0_93 = arith.constant 0 : index
    %143 = vector.load %arg8[%c2_91, %c1_92, %c0_93] : memref<10x18x16xf32, #tpu.memory_space<vmem>>, vector<1x16x16xf32>
    %144 = vector.shape_cast %143 : vector<1x16x16xf32> to vector<16x16xf32>
    %145 = vector.shape_cast %142 : vector<16x16xf32> to vector<1x16x16xf32>
    tpu.vector_store %arg8[%c2_91, %c1_92, %c0_93], %145 {strides = array<i32>} : memref<10x18x16xf32, #tpu.memory_space<vmem>>, vector<1x16x16xf32>,
    %146 = vector.extract_strided_slice %135 {offsets = [32, 0], sizes = [16, 16], strides = [1, 1]} : vector<128x16xf32> to vector<16x16xf32>
    %c3_94 = arith.constant 3 : index
    %c1_95 = arith.constant 1 : index
    %c0_96 = arith.constant 0 : index
    %147 = vector.load %arg8[%c3_94, %c1_95, %c0_96] : memref<10x18x16xf32, #tpu.memory_space<vmem>>, vector<1x16x16xf32>
    %148 = vector.shape_cast %147 : vector<1x16x16xf32> to vector<16x16xf32>
    %149 = vector.shape_cast %146 : vector<16x16xf32> to vector<1x16x16xf32>
    tpu.vector_store %arg8[%c3_94, %c1_95, %c0_96], %149 {strides = array<i32>} : memref<10x18x16xf32, #tpu.memory_space<vmem>>, vector<1x16x16xf32>,
    %150 = vector.extract_strided_slice %135 {offsets = [48, 0], sizes = [16, 16], strides = [1, 1]} : vector<128x16xf32> to vector<16x16xf32>
    %c4_97 = arith.constant 4 : index
    %c1_98 = arith.constant 1 : index
    %c0_99 = arith.constant 0 : index
    %151 = vector.load %arg8[%c4_97, %c1_98, %c0_99] : memref<10x18x16xf32, #tpu.memory_space<vmem>>, vector<1x16x16xf32>
    %152 = vector.shape_cast %151 : vector<1x16x16xf32> to vector<16x16xf32>
    %153 = vector.shape_cast %150 : vector<16x16xf32> to vector<1x16x16xf32>
    tpu.vector_store %arg8[%c4_97, %c1_98, %c0_99], %153 {strides = array<i32>} : memref<10x18x16xf32, #tpu.memory_space<vmem>>, vector<1x16x16xf32>,
    %154 = vector.extract_strided_slice %135 {offsets = [64, 0], sizes = [16, 16], strides = [1, 1]} : vector<128x16xf32> to vector<16x16xf32>
    %c5_100 = arith.constant 5 : index
    %c1_101 = arith.constant 1 : index
    %c0_102 = arith.constant 0 : index
    %155 = vector.load %arg8[%c5_100, %c1_101, %c0_102] : memref<10x18x16xf32, #tpu.memory_space<vmem>>, vector<1x16x16xf32>
    %156 = vector.shape_cast %155 : vector<1x16x16xf32> to vector<16x16xf32>
    %157 = vector.shape_cast %154 : vector<16x16xf32> to vector<1x16x16xf32>
    tpu.vector_store %arg8[%c5_100, %c1_101, %c0_102], %157 {strides = array<i32>} : memref<10x18x16xf32, #tpu.memory_space<vmem>>, vector<1x16x16xf32>,
    %158 = vector.extract_strided_slice %135 {offsets = [80, 0], sizes = [16, 16], strides = [1, 1]} : vector<128x16xf32> to vector<16x16xf32>
    %c6_103 = arith.constant 6 : index
    %c1_104 = arith.constant 1 : index
    %c0_105 = arith.constant 0 : index
    %159 = vector.load %arg8[%c6_103, %c1_104, %c0_105] : memref<10x18x16xf32, #tpu.memory_space<vmem>>, vector<1x16x16xf32>
    %160 = vector.shape_cast %159 : vector<1x16x16xf32> to vector<16x16xf32>
    %161 = vector.shape_cast %158 : vector<16x16xf32> to vector<1x16x16xf32>
    tpu.vector_store %arg8[%c6_103, %c1_104, %c0_105], %161 {strides = array<i32>} : memref<10x18x16xf32, #tpu.memory_space<vmem>>, vector<1x16x16xf32>,
    %162 = vector.extract_strided_slice %135 {offsets = [96, 0], sizes = [16, 16], strides = [1, 1]} : vector<128x16xf32> to vector<16x16xf32>
    %c7_106 = arith.constant 7 : index
    %c1_107 = arith.constant 1 : index
    %c0_108 = arith.constant 0 : index
    %163 = vector.load %arg8[%c7_106, %c1_107, %c0_108] : memref<10x18x16xf32, #tpu.memory_space<vmem>>, vector<1x16x16xf32>
    %164 = vector.shape_cast %163 : vector<1x16x16xf32> to vector<16x16xf32>
    %165 = vector.shape_cast %162 : vector<16x16xf32> to vector<1x16x16xf32>
    tpu.vector_store %arg8[%c7_106, %c1_107, %c0_108], %165 {strides = array<i32>} : memref<10x18x16xf32, #tpu.memory_space<vmem>>, vector<1x16x16xf32>,
    %166 = vector.extract_strided_slice %135 {offsets = [112, 0], sizes = [16, 16], strides = [1, 1]} : vector<128x16xf32> to vector<16x16xf32>
    %c8_109 = arith.constant 8 : index
    %c1_110 = arith.constant 1 : index
    %c0_111 = arith.constant 0 : index
    %167 = vector.load %arg8[%c8_109, %c1_110, %c0_111] : memref<10x18x16xf32, #tpu.memory_space<vmem>>, vector<1x16x16xf32>
    %168 = vector.shape_cast %167 : vector<1x16x16xf32> to vector<16x16xf32>
    %169 = vector.shape_cast %166 : vector<16x16xf32> to vector<1x16x16xf32>
    tpu.vector_store %arg8[%c8_109, %c1_110, %c0_111], %169 {strides = array<i32>} : memref<10x18x16xf32, #tpu.memory_space<vmem>>, vector<1x16x16xf32>,
    %c0_112 = arith.constant 0 : index
    %c0_113 = arith.constant 0 : index
    %170 = vector.load %arg4[%c0_112, %c0_113] : memref<144x16xf32, #tpu.memory_space<vmem>>, vector<144x16xf32>
    %c0_114 = arith.constant 0 : index
    %c0_115 = arith.constant 0 : index
    %171 = vector.load %arg5[%c0_114, %c0_115] : memref<1x16xf32, #tpu.memory_space<vmem>>, vector<1x16xf32>
    %c0_116 = arith.constant 0 : index
    %c0_117 = arith.constant 0 : index
    %c0_118 = arith.constant 0 : index
    %172 = vector.load %arg8[%c0_116, %c0_117, %c0_118] : memref<10x18x16xf32, #tpu.memory_space<vmem>>, vector<1x18x16xf32>
    %173 = vector.shape_cast %172 : vector<1x18x16xf32> to vector<18x16xf32>
    %174 = vector.extract_strided_slice %173 {offsets = [0, 0], sizes = [16, 16], strides = [1, 1]} : vector<18x16xf32> to vector<16x16xf32>
    %175 = vector.extract_strided_slice %173 {offsets = [1, 0], sizes = [16, 16], strides = [1, 1]} : vector<18x16xf32> to vector<16x16xf32>
    %176 = vector.extract_strided_slice %173 {offsets = [2, 0], sizes = [16, 16], strides = [1, 1]} : vector<18x16xf32> to vector<16x16xf32>
    %c1_119 = arith.constant 1 : index
    %c0_120 = arith.constant 0 : index
    %c0_121 = arith.constant 0 : index
    %177 = vector.load %arg8[%c1_119, %c0_120, %c0_121] : memref<10x18x16xf32, #tpu.memory_space<vmem>>, vector<1x18x16xf32>
    %178 = vector.shape_cast %177 : vector<1x18x16xf32> to vector<18x16xf32>
    %179 = vector.extract_strided_slice %178 {offsets = [0, 0], sizes = [16, 16], strides = [1, 1]} : vector<18x16xf32> to vector<16x16xf32>
    %180 = vector.extract_strided_slice %178 {offsets = [1, 0], sizes = [16, 16], strides = [1, 1]} : vector<18x16xf32> to vector<16x16xf32>
    %181 = vector.extract_strided_slice %178 {offsets = [2, 0], sizes = [16, 16], strides = [1, 1]} : vector<18x16xf32> to vector<16x16xf32>
    %c2_122 = arith.constant 2 : index
    %c0_123 = arith.constant 0 : index
    %c0_124 = arith.constant 0 : index
    %182 = vector.load %arg8[%c2_122, %c0_123, %c0_124] : memref<10x18x16xf32, #tpu.memory_space<vmem>>, vector<1x18x16xf32>
    %183 = vector.shape_cast %182 : vector<1x18x16xf32> to vector<18x16xf32>
    %184 = vector.extract_strided_slice %183 {offsets = [0, 0], sizes = [16, 16], strides = [1, 1]} : vector<18x16xf32> to vector<16x16xf32>
    %185 = vector.extract_strided_slice %183 {offsets = [1, 0], sizes = [16, 16], strides = [1, 1]} : vector<18x16xf32> to vector<16x16xf32>
    %186 = vector.extract_strided_slice %183 {offsets = [2, 0], sizes = [16, 16], strides = [1, 1]} : vector<18x16xf32> to vector<16x16xf32>
    %187 = tpu.concatenate %174, %175, %176, %179, %180, %181, %184, %185, %186 in 1 : vector<16x16xf32>, vector<16x16xf32>, vector<16x16xf32>, vector<16x16xf32>, vector<16x16xf32>, vector<16x16xf32>, vector<16x16xf32>, vector<16x16xf32>, vector<16x16xf32> -> vector<16x144xf32>
    %c2_125 = arith.constant 2 : index
    %c0_126 = arith.constant 0 : index
    %c0_127 = arith.constant 0 : index
    %188 = vector.load %arg8[%c2_125, %c0_126, %c0_127] : memref<10x18x16xf32, #tpu.memory_space<vmem>>, vector<1x18x16xf32>
    %189 = vector.shape_cast %188 : vector<1x18x16xf32> to vector<18x16xf32>
    %190 = vector.extract_strided_slice %189 {offsets = [0, 0], sizes = [16, 16], strides = [1, 1]} : vector<18x16xf32> to vector<16x16xf32>
    %191 = vector.extract_strided_slice %189 {offsets = [1, 0], sizes = [16, 16], strides = [1, 1]} : vector<18x16xf32> to vector<16x16xf32>
    %192 = vector.extract_strided_slice %189 {offsets = [2, 0], sizes = [16, 16], strides = [1, 1]} : vector<18x16xf32> to vector<16x16xf32>
    %c3_128 = arith.constant 3 : index
    %c0_129 = arith.constant 0 : index
    %c0_130 = arith.constant 0 : index
    %193 = vector.load %arg8[%c3_128, %c0_129, %c0_130] : memref<10x18x16xf32, #tpu.memory_space<vmem>>, vector<1x18x16xf32>
    %194 = vector.shape_cast %193 : vector<1x18x16xf32> to vector<18x16xf32>
    %195 = vector.extract_strided_slice %194 {offsets = [0, 0], sizes = [16, 16], strides = [1, 1]} : vector<18x16xf32> to vector<16x16xf32>
    %196 = vector.extract_strided_slice %194 {offsets = [1, 0], sizes = [16, 16], strides = [1, 1]} : vector<18x16xf32> to vector<16x16xf32>
    %197 = vector.extract_strided_slice %194 {offsets = [2, 0], sizes = [16, 16], strides = [1, 1]} : vector<18x16xf32> to vector<16x16xf32>
    %c4_131 = arith.constant 4 : index
    %c0_132 = arith.constant 0 : index
    %c0_133 = arith.constant 0 : index
    %198 = vector.load %arg8[%c4_131, %c0_132, %c0_133] : memref<10x18x16xf32, #tpu.memory_space<vmem>>, vector<1x18x16xf32>
    %199 = vector.shape_cast %198 : vector<1x18x16xf32> to vector<18x16xf32>
    %200 = vector.extract_strided_slice %199 {offsets = [0, 0], sizes = [16, 16], strides = [1, 1]} : vector<18x16xf32> to vector<16x16xf32>
    %201 = vector.extract_strided_slice %199 {offsets = [1, 0], sizes = [16, 16], strides = [1, 1]} : vector<18x16xf32> to vector<16x16xf32>
    %202 = vector.extract_strided_slice %199 {offsets = [2, 0], sizes = [16, 16], strides = [1, 1]} : vector<18x16xf32> to vector<16x16xf32>
    %203 = tpu.concatenate %190, %191, %192, %195, %196, %197, %200, %201, %202 in 1 : vector<16x16xf32>, vector<16x16xf32>, vector<16x16xf32>, vector<16x16xf32>, vector<16x16xf32>, vector<16x16xf32>, vector<16x16xf32>, vector<16x16xf32>, vector<16x16xf32> -> vector<16x144xf32>
    %c4_134 = arith.constant 4 : index
    %c0_135 = arith.constant 0 : index
    %c0_136 = arith.constant 0 : index
    %204 = vector.load %arg8[%c4_134, %c0_135, %c0_136] : memref<10x18x16xf32, #tpu.memory_space<vmem>>, vector<1x18x16xf32>
    %205 = vector.shape_cast %204 : vector<1x18x16xf32> to vector<18x16xf32>
    %206 = vector.extract_strided_slice %205 {offsets = [0, 0], sizes = [16, 16], strides = [1, 1]} : vector<18x16xf32> to vector<16x16xf32>
    %207 = vector.extract_strided_slice %205 {offsets = [1, 0], sizes = [16, 16], strides = [1, 1]} : vector<18x16xf32> to vector<16x16xf32>
    %208 = vector.extract_strided_slice %205 {offsets = [2, 0], sizes = [16, 16], strides = [1, 1]} : vector<18x16xf32> to vector<16x16xf32>
    %c5_137 = arith.constant 5 : index
    %c0_138 = arith.constant 0 : index
    %c0_139 = arith.constant 0 : index
    %209 = vector.load %arg8[%c5_137, %c0_138, %c0_139] : memref<10x18x16xf32, #tpu.memory_space<vmem>>, vector<1x18x16xf32>
    %210 = vector.shape_cast %209 : vector<1x18x16xf32> to vector<18x16xf32>
    %211 = vector.extract_strided_slice %210 {offsets = [0, 0], sizes = [16, 16], strides = [1, 1]} : vector<18x16xf32> to vector<16x16xf32>
    %212 = vector.extract_strided_slice %210 {offsets = [1, 0], sizes = [16, 16], strides = [1, 1]} : vector<18x16xf32> to vector<16x16xf32>
    %213 = vector.extract_strided_slice %210 {offsets = [2, 0], sizes = [16, 16], strides = [1, 1]} : vector<18x16xf32> to vector<16x16xf32>
    %c6_140 = arith.constant 6 : index
    %c0_141 = arith.constant 0 : index
    %c0_142 = arith.constant 0 : index
    %214 = vector.load %arg8[%c6_140, %c0_141, %c0_142] : memref<10x18x16xf32, #tpu.memory_space<vmem>>, vector<1x18x16xf32>
    %215 = vector.shape_cast %214 : vector<1x18x16xf32> to vector<18x16xf32>
    %216 = vector.extract_strided_slice %215 {offsets = [0, 0], sizes = [16, 16], strides = [1, 1]} : vector<18x16xf32> to vector<16x16xf32>
    %217 = vector.extract_strided_slice %215 {offsets = [1, 0], sizes = [16, 16], strides = [1, 1]} : vector<18x16xf32> to vector<16x16xf32>
    %218 = vector.extract_strided_slice %215 {offsets = [2, 0], sizes = [16, 16], strides = [1, 1]} : vector<18x16xf32> to vector<16x16xf32>
    %219 = tpu.concatenate %206, %207, %208, %211, %212, %213, %216, %217, %218 in 1 : vector<16x16xf32>, vector<16x16xf32>, vector<16x16xf32>, vector<16x16xf32>, vector<16x16xf32>, vector<16x16xf32>, vector<16x16xf32>, vector<16x16xf32>, vector<16x16xf32> -> vector<16x144xf32>
    %c6_143 = arith.constant 6 : index
    %c0_144 = arith.constant 0 : index
    %c0_145 = arith.constant 0 : index
    %220 = vector.load %arg8[%c6_143, %c0_144, %c0_145] : memref<10x18x16xf32, #tpu.memory_space<vmem>>, vector<1x18x16xf32>
    %221 = vector.shape_cast %220 : vector<1x18x16xf32> to vector<18x16xf32>
    %222 = vector.extract_strided_slice %221 {offsets = [0, 0], sizes = [16, 16], strides = [1, 1]} : vector<18x16xf32> to vector<16x16xf32>
    %223 = vector.extract_strided_slice %221 {offsets = [1, 0], sizes = [16, 16], strides = [1, 1]} : vector<18x16xf32> to vector<16x16xf32>
    %224 = vector.extract_strided_slice %221 {offsets = [2, 0], sizes = [16, 16], strides = [1, 1]} : vector<18x16xf32> to vector<16x16xf32>
    %c7_146 = arith.constant 7 : index
    %c0_147 = arith.constant 0 : index
    %c0_148 = arith.constant 0 : index
    %225 = vector.load %arg8[%c7_146, %c0_147, %c0_148] : memref<10x18x16xf32, #tpu.memory_space<vmem>>, vector<1x18x16xf32>
    %226 = vector.shape_cast %225 : vector<1x18x16xf32> to vector<18x16xf32>
    %227 = vector.extract_strided_slice %226 {offsets = [0, 0], sizes = [16, 16], strides = [1, 1]} : vector<18x16xf32> to vector<16x16xf32>
    %228 = vector.extract_strided_slice %226 {offsets = [1, 0], sizes = [16, 16], strides = [1, 1]} : vector<18x16xf32> to vector<16x16xf32>
    %229 = vector.extract_strided_slice %226 {offsets = [2, 0], sizes = [16, 16], strides = [1, 1]} : vector<18x16xf32> to vector<16x16xf32>
    %c8_149 = arith.constant 8 : index
    %c0_150 = arith.constant 0 : index
    %c0_151 = arith.constant 0 : index
    %230 = vector.load %arg8[%c8_149, %c0_150, %c0_151] : memref<10x18x16xf32, #tpu.memory_space<vmem>>, vector<1x18x16xf32>
    %231 = vector.shape_cast %230 : vector<1x18x16xf32> to vector<18x16xf32>
    %232 = vector.extract_strided_slice %231 {offsets = [0, 0], sizes = [16, 16], strides = [1, 1]} : vector<18x16xf32> to vector<16x16xf32>
    %233 = vector.extract_strided_slice %231 {offsets = [1, 0], sizes = [16, 16], strides = [1, 1]} : vector<18x16xf32> to vector<16x16xf32>
    %234 = vector.extract_strided_slice %231 {offsets = [2, 0], sizes = [16, 16], strides = [1, 1]} : vector<18x16xf32> to vector<16x16xf32>
    %235 = tpu.concatenate %222, %223, %224, %227, %228, %229, %232, %233, %234 in 1 : vector<16x16xf32>, vector<16x16xf32>, vector<16x16xf32>, vector<16x16xf32>, vector<16x16xf32>, vector<16x16xf32>, vector<16x16xf32>, vector<16x16xf32>, vector<16x16xf32> -> vector<16x144xf32>
    %236 = tpu.concatenate %187, %203, %219, %235 in 0 : vector<16x144xf32>, vector<16x144xf32>, vector<16x144xf32>, vector<16x144xf32> -> vector<64x144xf32>
    %cst_152 = arith.constant dense<0.000000e+00> : vector<64x16xf32>
    %237 = tpu.matmul %236, %170, %cst_152 {dimension_numbers = #tpu.dot_dimension_numbers<[1], [0], [0], [1], [0, 0, 1, 1], [], []>} : vector<64x144xf32>, vector<144x16xf32>, vector<64x16xf32> -> vector<64x16xf32>
    %238 = vector.broadcast %171 : vector<1x16xf32> to vector<64x16xf32>
    %239 = arith.addf %237, %238 : vector<64x16xf32>
    %cst_153 = arith.constant 0.000000e+00 : f32
    %240 = vector.broadcast %cst_153 : f32 to vector<64x16xf32>
    %241 = arith.maximumf %239, %240 : vector<64x16xf32>
    %242 = vector.extract_strided_slice %241 {offsets = [0, 0], sizes = [16, 16], strides = [1, 1]} : vector<64x16xf32> to vector<16x16xf32>
    %243 = vector.extract_strided_slice %241 {offsets = [16, 0], sizes = [16, 16], strides = [1, 1]} : vector<64x16xf32> to vector<16x16xf32>
    %244 = vector.extract_strided_slice %241 {offsets = [32, 0], sizes = [16, 16], strides = [1, 1]} : vector<64x16xf32> to vector<16x16xf32>
    %245 = vector.extract_strided_slice %241 {offsets = [48, 0], sizes = [16, 16], strides = [1, 1]} : vector<64x16xf32> to vector<16x16xf32>
    %246 = tpu.concatenate %242, %243, %244, %245 in 1 : vector<16x16xf32>, vector<16x16xf32>, vector<16x16xf32>, vector<16x16xf32> -> vector<16x64xf32>
    %c0_154 = arith.constant 0 : index
    %c0_155 = arith.constant 0 : index
    %247 = vector.load %arg6[%c0_154, %c0_155] : memref<64x16xf32, #tpu.memory_space<vmem>>, vector<64x16xf32>
    %cst_156 = arith.constant dense<0.000000e+00> : vector<16x16xf32>
    %248 = tpu.matmul %246, %247, %cst_156 {dimension_numbers = #tpu.dot_dimension_numbers<[1], [0], [0], [1], [0, 0, 1, 1], [], []>} : vector<16x64xf32>, vector<64x16xf32>, vector<16x16xf32> -> vector<16x16xf32>
    %c0_157 = arith.constant 0 : index
    %c0_158 = arith.constant 0 : index
    %c0_159 = arith.constant 0 : index
    %249 = vector.load %arg7[%c0_157, %c0_158, %c0_159] : memref<1x16x16xf32, #tpu.memory_space<vmem>>, vector<1x16x16xf32>
    %250 = vector.shape_cast %249 : vector<1x16x16xf32> to vector<16x16xf32>
    %251 = vector.shape_cast %248 : vector<16x16xf32> to vector<1x16x16xf32>
    tpu.vector_store %arg7[%c0_157, %c0_158, %c0_159], %251 {strides = array<i32>} : memref<1x16x16xf32, #tpu.memory_space<vmem>>, vector<1x16x16xf32>,
    return
  }
  func.func @transform_0(%arg0: i32) -> (i32, i32, i32, i32) {
    %c0_i32 = arith.constant 0 : i32
    %c0_i32_0 = arith.constant 0 : i32
    %c0_i32_1 = arith.constant 0 : i32
    %c0_i32_2 = arith.constant 0 : i32
    return %arg0, %c0_i32, %c0_i32_0, %c0_i32_1 : i32, i32, i32, i32
  }
  func.func @transform_1(%arg0: i32) -> (i32, i32) {
    %c0_i32 = arith.constant 0 : i32
    %c0_i32_0 = arith.constant 0 : i32
    %c0_i32_1 = arith.constant 0 : i32
    return %c0_i32, %c0_i32_0 : i32, i32
  }
  func.func @transform_2(%arg0: i32) -> (i32, i32) {
    %c0_i32 = arith.constant 0 : i32
    %c0_i32_0 = arith.constant 0 : i32
    %c0_i32_1 = arith.constant 0 : i32
    return %c0_i32, %c0_i32_0 : i32, i32
  }
  func.func @transform_3(%arg0: i32) -> (i32, i32) {
    %c0_i32 = arith.constant 0 : i32
    %c0_i32_0 = arith.constant 0 : i32
    %c0_i32_1 = arith.constant 0 : i32
    return %c0_i32, %c0_i32_0 : i32, i32
  }
  func.func @transform_4(%arg0: i32) -> (i32, i32) {
    %c0_i32 = arith.constant 0 : i32
    %c0_i32_0 = arith.constant 0 : i32
    %c0_i32_1 = arith.constant 0 : i32
    return %c0_i32, %c0_i32_0 : i32, i32
  }
  func.func @transform_5(%arg0: i32) -> (i32, i32) {
    %c0_i32 = arith.constant 0 : i32
    %c0_i32_0 = arith.constant 0 : i32
    %c0_i32_1 = arith.constant 0 : i32
    return %c0_i32, %c0_i32_0 : i32, i32
  }
  func.func @transform_6(%arg0: i32) -> (i32, i32, i32) {
    %c0_i32 = arith.constant 0 : i32
    %c0_i32_0 = arith.constant 0 : i32
    %c0_i32_1 = arith.constant 0 : i32
    return %arg0, %c0_i32, %c0_i32_0 : i32, i32, i32
  }
}

</mosaic_0001>

<llo_original>
// kernel: seqconvs_forward.1
$region0: #{seqconvs_forward.1}
  #allocation0 [shape = 'u32[]', space=smem, size = 0x4, offset = 0x4, fixed_abs, tag = 'smem constant byte address 0x4 - core index']
  #allocation1 [shape = 'u32[144,128]{1,0:T(1,128)}', space=vmem, size = 0x12000, scoped, tag = 'internal scratch']
  #allocation2 [shape = 'f32[10,18,16]{2,1,0:T(8,128)}', space=vmem, size = 0x1e000, scoped, tag = 'scratch operand']
  %s0 = inlined_call_operand.vmem [shape: f32[2,18,18,16], index: 0, kind: input, shape index: {}]
  %s1 = inlined_call_operand.vmem [shape: f32[144,16], index: 1, kind: input, shape index: {}]
  %s2 = inlined_call_operand.vmem [shape: f32[1,16], index: 2, kind: input, shape index: {}]
  %s3 = inlined_call_operand.vmem [shape: f32[144,16], index: 3, kind: input, shape index: {}]
  %s4 = inlined_call_operand.vmem [shape: f32[1,16], index: 4, kind: input, shape index: {}]
  %s5 = inlined_call_operand.vmem [shape: f32[64,16], index: 5, kind: input, shape index: {}]
  %s6 = inlined_call_operand.vmem [shape: f32[2,16,16], index: 6, kind: output, shape index: {}]
  %s7 = sld [smem:[#allocation0]]
  $region57: #{seqconvs_forward.1} parent=0
    _
  %s9 = ssub.s32 1, %s7
  %s10 = scalar_select 0, %s9, %s7
  loop: start=0, step=1, limit=4
  $region2: #{seqconvs_forward.1} parent=0 // loop_pre_header
    _
  $region3: #{seqconvs_forward.1} parent=0 // loop_header
    %s12 = sphi 0, %s16
    %p13 = scmp.ge.s32.totalorder %s12, 4
    %s22 = sphi 0, %s24
    %s25 = sphi 0, %s22
    %s26 = sphi 0, %s25
    %s42 = sphi 0, %s26
    %s46 = sphi 0, %s46
    %s48 = sphi 0, %s46
    %s49 = sphi 0, %s48
    %s63 = sphi 0, %s49
    %s67 = sphi 0, %s67
    %s69 = sphi 0, %s67
    %s70 = sphi 0, %s69
    %s84 = sphi 0, %s70
    %s88 = sphi 0, %s88
    %s90 = sphi 0, %s88
    %s91 = sphi 0, %s90
    %s105 = sphi 0, %s91
    %s109 = sphi 0, %s109
    %s111 = sphi 0, %s109
    %s112 = sphi 0, %s111
    %s126 = sphi 0, %s112
    %s130 = sphi 0, %s130
    %s132 = sphi 0, %s130
    %s133 = sphi 0, %s132
    %s147 = sphi 0, %s133
    %s153 = sphi 0, %s155
    %s156 = sphi 0, %s153
    %s157 = sphi 0, %s156
    %s173 = sphi 0, %s157
  $region4: #{seqconvs_forward.1} parent=0 // loop_header_branch
    %15 = sbr.rel (%p13) target = $region8
  $region5: #{seqconvs_forward.1} parent=0 // loop_body
    %s17 = ssub.s32 %s12, 1
    %s18 = ssub.s32 %s12, 2
    %s19 = sadd.s32 %s12, 1
    %s20 = ssub.s32 %s12, %s19
    %p21 = scmp.eq.s32.totalorder %s20, 0
    %s23 = sadd.s32 %s22, 1
    %s24 = scalar_select %p21, %s22, %s23
    %p27 = pneg %p21
    %p28 = scmp.eq.s32.totalorder %s12, 1
    %p29 = por %p27, %p28
    %p30 = scmp.ne.s32.totalorder %s22, %s25
    %p31 = scmp.eq.s32.totalorder %s12, 0
    %p32 = por %p30, %p31
    %p33 = scmp.ne.s32.totalorder %s22, %s25
    %p34 = scmp.eq.s32.totalorder %s17, 1
    %p35 = por %p33, %p34
    %p36 = scmp.ne.s32.totalorder %s25, %s26
    %p37 = scmp.eq.s32.totalorder %s17, 0
    %p38 = por %p36, %p37
    %p39 = scmp.ne.s32.totalorder %s25, %s26
    %p40 = scmp.eq.s32.totalorder %s18, 1
    %p41 = por %p39, %p40
    %p43 = scmp.ne.s32.totalorder %s26, %s42
    %p44 = scmp.eq.s32.totalorder %s18, 0
    %p45 = por %p43, %p44
    %s47 = sadd.s32 %s46, 1
    %p50 = scmp.eq.s32.totalorder %s12, 1
    %p51 = scmp.ne.s32.totalorder %s46, %s48
    %p52 = scmp.eq.s32.totalorder %s12, 0
    %p53 = por %p51, %p52
    %p54 = scmp.ne.s32.totalorder %s46, %s48
    %p55 = scmp.eq.s32.totalorder %s17, 1
    %p56 = por %p54, %p55
    %p57 = scmp.ne.s32.totalorder %s48, %s49
    %p58 = scmp.eq.s32.totalorder %s17, 0
    %p59 = por %p57, %p58
    %p60 = scmp.ne.s32.totalorder %s48, %s49
    %p61 = scmp.eq.s32.totalorder %s18, 1
    %p62 = por %p60, %p61
    %p64 = scmp.ne.s32.totalorder %s49, %s63
    %p65 = scmp.eq.s32.totalorder %s18, 0
    %p66 = por %p64, %p65
    %s68 = sadd.s32 %s67, 1
    %p71 = scmp.eq.s32.totalorder %s12, 1
    %p72 = scmp.ne.s32.totalorder %s67, %s69
    %p73 = scmp.eq.s32.totalorder %s12, 0
    %p74 = por %p72, %p73
    %p75 = scmp.ne.s32.totalorder %s67, %s69
    %p76 = scmp.eq.s32.totalorder %s17, 1
    %p77 = por %p75, %p76
    %p78 = scmp.ne.s32.totalorder %s69, %s70
    %p79 = scmp.eq.s32.totalorder %s17, 0
    %p80 = por %p78, %p79
    %p81 = scmp.ne.s32.totalorder %s69, %s70
    %p82 = scmp.eq.s32.totalorder %s18, 1
    %p83 = por %p81, %p82
    %p85 = scmp.ne.s32.totalorder %s70, %s84
    %p86 = scmp.eq.s32.totalorder %s18, 0
    %p87 = por %p85, %p86
    %s89 = sadd.s32 %s88, 1
    %p92 = scmp.eq.s32.totalorder %s12, 1
    %p93 = scmp.ne.s32.totalorder %s88, %s90
    %p94 = scmp.eq.s32.totalorder %s12, 0
    %p95 = por %p93, %p94
    %p96 = scmp.ne.s32.totalorder %s88, %s90
    %p97 = scmp.eq.s32.totalorder %s17, 1
    %p98 = por %p96, %p97
    %p99 = scmp.ne.s32.totalorder %s90, %s91
    %p100 = scmp.eq.s32.totalorder %s17, 0
    %p101 = por %p99, %p100
    %p102 = scmp.ne.s32.totalorder %s90, %s91
    %p103 = scmp.eq.s32.totalorder %s18, 1
    %p104 = por %p102, %p103
    %p106 = scmp.ne.s32.totalorder %s91, %s105
    %p107 = scmp.eq.s32.totalorder %s18, 0
    %p108 = por %p106, %p107
    %s110 = sadd.s32 %s109, 1
    %p113 = scmp.eq.s32.totalorder %s12, 1
    %p114 = scmp.ne.s32.totalorder %s109, %s111
    %p115 = scmp.eq.s32.totalorder %s12, 0
    %p116 = por %p114, %p115
    %p117 = scmp.ne.s32.totalorder %s109, %s111
    %p118 = scmp.eq.s32.totalorder %s17, 1
    %p119 = por %p117, %p118
    %p120 = scmp.ne.s32.totalorder %s111, %s112
    %p121 = scmp.eq.s32.totalorder %s17, 0
    %p122 = por %p120, %p121
    %p123 = scmp.ne.s32.totalorder %s111, %s112
    %p124 = scmp.eq.s32.totalorder %s18, 1
    %p125 = por %p123, %p124
    %p127 = scmp.ne.s32.totalorder %s112, %s126
    %p128 = scmp.eq.s32.totalorder %s18, 0
    %p129 = por %p127, %p128
    %s131 = sadd.s32 %s130, 1
    %p134 = scmp.eq.s32.totalorder %s12, 1
    %p135 = scmp.ne.s32.totalorder %s130, %s132
    %p136 = scmp.eq.s32.totalorder %s12, 0
    %p137 = por %p135, %p136
    %p138 = scmp.ne.s32.totalorder %s130, %s132
    %p139 = scmp.eq.s32.totalorder %s17, 1
    %p140 = por %p138, %p139
    %p141 = scmp.ne.s32.totalorder %s132, %s133
    %p142 = scmp.eq.s32.totalorder %s17, 0
    %p143 = por %p141, %p142
    %p144 = scmp.ne.s32.totalorder %s132, %s133
    %p145 = scmp.eq.s32.totalorder %s18, 1
    %p146 = por %p144, %p145
    %p148 = scmp.ne.s32.totalorder %s133, %s147
    %p149 = scmp.eq.s32.totalorder %s18, 0
    %p150 = por %p148, %p149
    %s151 = ssub.s32 %s12, %s19
    %p152 = scmp.eq.s32.totalorder %s151, 0
    %s154 = sadd.s32 %s153, 1
    %s155 = scalar_select %p152, %s153, %s154
    %p158 = pneg %p152
    %p159 = scmp.eq.s32.totalorder %s12, 1
    %p160 = por %p158, %p159
    %p161 = scmp.ne.s32.totalorder %s153, %s156
    %p162 = scmp.eq.s32.totalorder %s12, 0
    %p163 = por %p161, %p162
    %p164 = scmp.ne.s32.totalorder %s153, %s156
    %p165 = scmp.eq.s32.totalorder %s17, 1
    %p166 = por %p164, %p165
    %p167 = scmp.ne.s32.totalorder %s156, %s157
    %p168 = scmp.eq.s32.totalorder %s17, 0
    %p169 = por %p167, %p168
    %p170 = scmp.ne.s32.totalorder %s156, %s157
    %p171 = scmp.eq.s32.totalorder %s18, 1
    %p172 = por %p170, %p171
    %p174 = scmp.ne.s32.totalorder %s157, %s173
    %p175 = scmp.eq.s32.totalorder %s18, 0
    %p176 = por %p174, %p175
    %p177 = scmp.le.s32.totalorder 1, %s12
    %p178 = scmp.lt.s32.totalorder %s12, 3
    %p179 = pnand %p177, %p178
    %p180 = pneg %p179
    // Predicated region
    $region9: #{seqconvs_forward.1} parent=5 // pred_check
      _
    $region10: #{seqconvs_forward.1} parent=5 // pred_check_branch
      %182 = sbr.rel (%p179) target = $region12
    $region11: #{seqconvs_forward.1} parent=5 // pred_region
      %s183 = ssub.s32 %s12, 1
      // Predicated region
      $region13: #{seqconvs_forward.1} parent=11 // pred_check
        %p184 = pneg %p59
      $region14: #{seqconvs_forward.1} parent=11 // pred_check_branch
        %186 = sbr.rel (%p184) target = $region16
      $region15: #{seqconvs_forward.1} parent=11 // pred_region
        _
      $region16: #{seqconvs_forward.1} parent=11 // pred_fallthru
        _
      // Predicated region
      $region17: #{seqconvs_forward.1} parent=11 // pred_check
        %p187 = pneg %p80
      $region18: #{seqconvs_forward.1} parent=11 // pred_check_branch
        %189 = sbr.rel (%p187) target = $region20
      $region19: #{seqconvs_forward.1} parent=11 // pred_region
        _
      $region20: #{seqconvs_forward.1} parent=11 // pred_fallthru
        _
      // Predicated region
      $region21: #{seqconvs_forward.1} parent=11 // pred_check
        %p190 = pneg %p101
      $region22: #{seqconvs_forward.1} parent=11 // pred_check_branch
        %192 = sbr.rel (%p190) target = $region24
      $region23: #{seqconvs_forward.1} parent=11 // pred_region
        _
      $region24: #{seqconvs_forward.1} parent=11 // pred_fallthru
        _
      // Predicated region
      $region25: #{seqconvs_forward.1} parent=11 // pred_check
        %p193 = pneg %p122
      $region26: #{seqconvs_forward.1} parent=11 // pred_check_branch
        %195 = sbr.rel (%p193) target = $region28
      $region27: #{seqconvs_forward.1} parent=11 // pred_region
        _
      $region28: #{seqconvs_forward.1} parent=11 // pred_fallthru
        _
      // Predicated region
      $region29: #{seqconvs_forward.1} parent=11 // pred_check
        %p196 = pneg %p143
      $region30: #{seqconvs_forward.1} parent=11 // pred_check_branch
        %198 = sbr.rel (%p196) target = $region32
      $region31: #{seqconvs_forward.1} parent=11 // pred_region
        _
      $region32: #{seqconvs_forward.1} parent=11 // pred_fallthru
        _
    $region12: #{seqconvs_forward.1} parent=5 // pred_fallthru
      _
    %p199 = scmp.lt.s32.totalorder %s12, 2
    // Predicated region
    $region33: #{seqconvs_forward.1} parent=5 // pred_check
      %p200 = pneg %p199
    $region34: #{seqconvs_forward.1} parent=5 // pred_check_branch
      %202 = sbr.rel (%p200) target = $region36
    $region35: #{seqconvs_forward.1} parent=5 // pred_region
      // Predicated region
      $region37: #{seqconvs_forward.1} parent=35 // pred_check
        %p203 = pneg %p32
      $region38: #{seqconvs_forward.1} parent=35 // pred_check_branch
        %205 = sbr.rel (%p203) target = $region40
      $region39: #{seqconvs_forward.1} parent=35 // pred_region
        %p206 = scmp.lt.s32.totalorder %s12, 1
        %s207 = scalar_select %p206, %s12, 1
        %s208 = smul.addr %s207, 54
        %s209 = smul.addr %s208, 8
        %s210 = scalar_lea.vmem %s0, %s209
      $region40: #{seqconvs_forward.1} parent=35 // pred_fallthru
        _
    $region36: #{seqconvs_forward.1} parent=5 // pred_fallthru
      _
    %p211 = scmp.le.s32.totalorder 1, %s12
    %p212 = scmp.lt.s32.totalorder %s12, 3
    %p213 = pnand %p211, %p212
    %p214 = pneg %p213
    // Predicated region
    $region41: #{seqconvs_forward.1} parent=5 // pred_check
      _
    $region42: #{seqconvs_forward.1} parent=5 // pred_check_branch
      %216 = sbr.rel (%p213) target = $region44
    $region43: #{seqconvs_forward.1} parent=5 // pred_region
      %s217 = ssub.s32 %s12, 1
      %p218 = scmp.lt.s32.totalorder %s17, 1
      %s219 = scalar_select %p218, %s17, 1
      %s220 = smul.addr %s219, 54
      %s221 = smul.addr %s220, 8
      %s222 = scalar_lea.vmem %s0, %s221
      %p223 = pneg %p38
      %p224 = pneg %p35
      %p225 = pneg %p59
      %p226 = pneg %p56
      %p227 = pneg %p80
      %p228 = pneg %p77
      %p229 = pneg %p101
      %p230 = pneg %p98
      %p231 = pneg %p122
      %p232 = pneg %p119
      %p233 = pneg %p143
      %p234 = pneg %p140
      %p235 = pneg %p169
      %p236 = pneg %p166
      %p237 = scmp.lt.s32.totalorder %s17, 1
      %s238 = scalar_select %p237, %s17, 1
      %s239 = smul.addr %s238, 2
      %s240 = smul.addr %s239, 8
      %s241 = scalar_lea.vmem %s6, %s240
      %p242 = scmp.lt.s32.totalorder %s17, 1
      %s243 = scalar_select %p242, %s17, 1
      %s244 = smul.addr %s243, 54
      %s245 = smul.addr %s244, 8
      %s246 = scalar_lea.vmem %s0, %s245
      %p247 = scmp.lt.s32.totalorder %s17, 1
      %s248 = scalar_select %p247, %s17, 1
      %s249 = smul.addr %s248, 2
      %s250 = smul.addr %s249, 8
      %s251 = scalar_lea.vmem %s6, %s250
      %v252 = vld [vmem:[%s1] sm:$0xff]
      %v253 = vld [vmem:[%s1 + $0x8] sm:$0xff]
      %v254 = vld [vmem:[%s1 + $0x10] sm:$0xff]
      %v255 = vld [vmem:[%s1 + $0x18] sm:$0xff]
      %v256 = vld [vmem:[%s1 + $0x20] sm:$0xff]
      %v257 = vld [vmem:[%s1 + $0x28] sm:$0xff]
      %v258 = vld [vmem:[%s1 + $0x30] sm:$0xff]
      %v259 = vld [vmem:[%s1 + $0x38] sm:$0xff]
      %v260 = vld [vmem:[%s1 + $0x40] sm:$0xff]
      %v261 = vld [vmem:[%s1 + $0x48] sm:$0xff]
      %v262 = vld [vmem:[%s1 + $0x50] sm:$0xff]
      %v263 = vld [vmem:[%s1 + $0x58] sm:$0xff]
      %v264 = vld [vmem:[%s1 + $0x60] sm:$0xff]
      %v265 = vld [vmem:[%s1 + $0x68] sm:$0xff]
      %v266 = vld [vmem:[%s1 + $0x70] sm:$0xff]
      %v267 = vld [vmem:[%s1 + $0x78] sm:$0xff]
      %v268 = vld [vmem:[%s1 + $0x80] sm:$0xff]
      %v269 = vld [vmem:[%s1 + $0x88] sm:$0xff]
      %v270 = vld [vmem:[%s2] sm:$0x1]
      %v271 = vld [vmem:[%s246] sm:$0xff]
      %v272 = vld [vmem:[%s246 + $0x8] sm:$0xff]
      %v273 = vld [vmem:[%s246 + $0x10] sm:$0x3]
      %s274 = scalar_lea.vmem %s246, 24
      %v275 = vld [vmem:[%s274] sm:$0xff]
      %v276 = vld [vmem:[%s274 + $0x8] sm:$0xff]
      %v277 = vld [vmem:[%s274 + $0x10] sm:$0x3]
      %s278 = scalar_lea.vmem %s246, 48
      %v279 = vld [vmem:[%s278] sm:$0xff]
      %v280 = vld [vmem:[%s278 + $0x8] sm:$0xff]
      %v281 = vld [vmem:[%s278 + $0x10] sm:$0x3]
      %vm285 = vcmask 1046528
      %v286 = vrot.slane %v271, 1
      %v287 = vrot.slane %v272, 1
      %v288 = vsel %vm285, %v286, %v287
      %v289 = vrot.slane %v273, 1
      %v290 = vsel %vm285, %v287, %v289
      %291 = vrot.lane.b32.xlu0 %v288, 16
      %v292 = vpop.permute.xlu0 %291
      %293 = vrot.lane.b32.xlu0 %v290, 16
      %v294 = vpop.permute.xlu0 %293
      %vm297 = vcmask 1045504
      %v298 = vrot.slane %v271, 2
      %v299 = vrot.slane %v272, 2
      %v300 = vsel %vm297, %v298, %v299
      %v301 = vrot.slane %v273, 2
      %v302 = vsel %vm297, %v299, %v301
      %303 = vrot.lane.b32.xlu0 %v300, 32
      %v304 = vpop.permute.xlu0 %303
      %305 = vrot.lane.b32.xlu0 %v302, 32
      %v306 = vpop.permute.xlu0 %305
      %311 = vrot.lane.b32.xlu0 %v275, 48
      %v312 = vpop.permute.xlu0 %311
      %313 = vrot.lane.b32.xlu0 %v276, 48
      %v314 = vpop.permute.xlu0 %313
      %v318 = vrot.slane %v275, 1
      %v319 = vrot.slane %v276, 1
      %v320 = vsel %vm285, %v318, %v319
      %v321 = vrot.slane %v277, 1
      %v322 = vsel %vm285, %v319, %v321
      %323 = vrot.lane.b32.xlu0 %v320, 64
      %v324 = vpop.permute.xlu0 %323
      %325 = vrot.lane.b32.xlu0 %v322, 64
      %v326 = vpop.permute.xlu0 %325
      %v329 = vrot.slane %v275, 2
      %v330 = vrot.slane %v276, 2
      %v331 = vsel %vm297, %v329, %v330
      %v332 = vrot.slane %v277, 2
      %v333 = vsel %vm297, %v330, %v332
      %334 = vrot.lane.b32.xlu0 %v331, 80
      %v335 = vpop.permute.xlu0 %334
      %336 = vrot.lane.b32.xlu0 %v333, 80
      %v337 = vpop.permute.xlu0 %336
      %342 = vrot.lane.b32.xlu0 %v279, 96
      %v343 = vpop.permute.xlu0 %342
      %344 = vrot.lane.b32.xlu0 %v280, 96
      %v345 = vpop.permute.xlu0 %344
      %v349 = vrot.slane %v279, 1
      %v350 = vrot.slane %v280, 1
      %v351 = vsel %vm285, %v349, %v350
      %v352 = vrot.slane %v281, 1
      %v353 = vsel %vm285, %v350, %v352
      %354 = vrot.lane.b32.xlu0 %v351, 112
      %v355 = vpop.permute.xlu0 %354
      %356 = vrot.lane.b32.xlu0 %v353, 112
      %v357 = vpop.permute.xlu0 %356
      %v360 = vrot.slane %v279, 2
      %v361 = vrot.slane %v280, 2
      %v362 = vsel %vm297, %v360, %v361
      %v363 = vrot.slane %v281, 2
      %v364 = vsel %vm297, %v361, %v363
      %vm365 = vcmask 130048
      %v366 = vsel %vm365, %v271, %v292
      %v367 = vsel %vm365, %v272, %v294
      %vm368 = vcmask 261120
      %v369 = vsel %vm368, %v366, %v304
      %v370 = vsel %vm368, %v367, %v306
      %vm371 = vcmask 392192
      %v372 = vsel %vm371, %v369, %v312
      %v373 = vsel %vm371, %v370, %v314
      %vm374 = vcmask 523264
      %v375 = vsel %vm374, %v372, %v324
      %v376 = vsel %vm374, %v373, %v326
      %vm377 = vcmask 654336
      %v378 = vsel %vm377, %v375, %v335
      %v379 = vsel %vm377, %v376, %v337
      %vm380 = vcmask 785408
      %v381 = vsel %vm380, %v378, %v343
      %v382 = vsel %vm380, %v379, %v345
      %vm383 = vcmask 916480
      %v384 = vsel %vm383, %v381, %v355
      %v385 = vsel %vm383, %v382, %v357
      %s386 = scalar_lea.vmem %s246, 72
      %v387 = vld [vmem:[%s386] sm:$0xff]
      %v388 = vld [vmem:[%s386 + $0x8] sm:$0xff]
      %v389 = vld [vmem:[%s386 + $0x10] sm:$0x3]
      %s390 = scalar_lea.vmem %s246, 96
      %v391 = vld [vmem:[%s390] sm:$0xff]
      %v392 = vld [vmem:[%s390 + $0x8] sm:$0xff]
      %v393 = vld [vmem:[%s390 + $0x10] sm:$0x3]
      %394 = vrot.lane.b32.xlu0 %v351, 16
      %v395 = vpop.permute.xlu0 %394
      %396 = vrot.lane.b32.xlu0 %v353, 16
      %v397 = vpop.permute.xlu0 %396
      %400 = vrot.lane.b32.xlu0 %v362, 32
      %v401 = vpop.permute.xlu0 %400
      %402 = vrot.lane.b32.xlu0 %v364, 32
      %v403 = vpop.permute.xlu0 %402
      %408 = vrot.lane.b32.xlu0 %v387, 48
      %v409 = vpop.permute.xlu0 %408
      %410 = vrot.lane.b32.xlu0 %v388, 48
      %v411 = vpop.permute.xlu0 %410
      %v415 = vrot.slane %v387, 1
      %v416 = vrot.slane %v388, 1
      %v417 = vsel %vm285, %v415, %v416
      %v418 = vrot.slane %v389, 1
      %v419 = vsel %vm285, %v416, %v418
      %420 = vrot.lane.b32.xlu0 %v417, 64
      %v421 = vpop.permute.xlu0 %420
      %422 = vrot.lane.b32.xlu0 %v419, 64
      %v423 = vpop.permute.xlu0 %422
      %v426 = vrot.slane %v387, 2
      %v427 = vrot.slane %v388, 2
      %v428 = vsel %vm297, %v426, %v427
      %v429 = vrot.slane %v389, 2
      %v430 = vsel %vm297, %v427, %v429
      %431 = vrot.lane.b32.xlu0 %v428, 80
      %v432 = vpop.permute.xlu0 %431
      %433 = vrot.lane.b32.xlu0 %v430, 80
      %v434 = vpop.permute.xlu0 %433
      %439 = vrot.lane.b32.xlu0 %v391, 96
      %v440 = vpop.permute.xlu0 %439
      %441 = vrot.lane.b32.xlu0 %v392, 96
      %v442 = vpop.permute.xlu0 %441
      %v446 = vrot.slane %v391, 1
      %v447 = vrot.slane %v392, 1
      %v448 = vsel %vm285, %v446, %v447
      %v449 = vrot.slane %v393, 1
      %v450 = vsel %vm285, %v447, %v449
      %451 = vrot.lane.b32.xlu0 %v448, 112
      %v452 = vpop.permute.xlu0 %451
      %453 = vrot.lane.b32.xlu0 %v450, 112
      %v454 = vpop.permute.xlu0 %453
      %v457 = vrot.slane %v391, 2
      %v458 = vrot.slane %v392, 2
      %v459 = vsel %vm297, %v457, %v458
      %v460 = vrot.slane %v393, 2
      %v461 = vsel %vm297, %v458, %v460
      %v462 = vsel %vm365, %v279, %v395
      %v463 = vsel %vm365, %v280, %v397
      %v464 = vsel %vm368, %v462, %v401
      %v465 = vsel %vm368, %v463, %v403
      %v466 = vsel %vm371, %v464, %v409
      %v467 = vsel %vm371, %v465, %v411
      %v468 = vsel %vm374, %v466, %v421
      %v469 = vsel %vm374, %v467, %v423
      %v470 = vsel %vm377, %v468, %v432
      %v471 = vsel %vm377, %v469, %v434
      %v472 = vsel %vm380, %v470, %v440
      %v473 = vsel %vm380, %v471, %v442
      %v474 = vsel %vm383, %v472, %v452
      %v475 = vsel %vm383, %v473, %v454
      %s476 = scalar_lea.vmem %s246, 120
      %v477 = vld [vmem:[%s476] sm:$0xff]
      %v478 = vld [vmem:[%s476 + $0x8] sm:$0xff]
      %v479 = vld [vmem:[%s476 + $0x10] sm:$0x3]
      %s480 = scalar_lea.vmem %s246, 144
      %v481 = vld [vmem:[%s480] sm:$0xff]
      %v482 = vld [vmem:[%s480 + $0x8] sm:$0xff]
      %v483 = vld [vmem:[%s480 + $0x10] sm:$0x3]
      %484 = vrot.lane.b32.xlu0 %v448, 16
      %v485 = vpop.permute.xlu0 %484
      %486 = vrot.lane.b32.xlu0 %v450, 16
      %v487 = vpop.permute.xlu0 %486
      %490 = vrot.lane.b32.xlu0 %v459, 32
      %v491 = vpop.permute.xlu0 %490
      %492 = vrot.lane.b32.xlu0 %v461, 32
      %v493 = vpop.permute.xlu0 %492
      %498 = vrot.lane.b32.xlu0 %v477, 48
      %v499 = vpop.permute.xlu0 %498
      %500 = vrot.lane.b32.xlu0 %v478, 48
      %v501 = vpop.permute.xlu0 %500
      %v505 = vrot.slane %v477, 1
      %v506 = vrot.slane %v478, 1
      %v507 = vsel %vm285, %v505, %v506
      %v508 = vrot.slane %v479, 1
      %v509 = vsel %vm285, %v506, %v508
      %510 = vrot.lane.b32.xlu0 %v507, 64
      %v511 = vpop.permute.xlu0 %510
      %512 = vrot.lane.b32.xlu0 %v509, 64
      %v513 = vpop.permute.xlu0 %512
      %v516 = vrot.slane %v477, 2
      %v517 = vrot.slane %v478, 2
      %v518 = vsel %vm297, %v516, %v517
      %v519 = vrot.slane %v479, 2
      %v520 = vsel %vm297, %v517, %v519
      %521 = vrot.lane.b32.xlu0 %v518, 80
      %v522 = vpop.permute.xlu0 %521
      %523 = vrot.lane.b32.xlu0 %v520, 80
      %v524 = vpop.permute.xlu0 %523
      %529 = vrot.lane.b32.xlu0 %v481, 96
      %v530 = vpop.permute.xlu0 %529
      %531 = vrot.lane.b32.xlu0 %v482, 96
      %v532 = vpop.permute.xlu0 %531
      %v536 = vrot.slane %v481, 1
      %v537 = vrot.slane %v482, 1
      %v538 = vsel %vm285, %v536, %v537
      %v539 = vrot.slane %v483, 1
      %v540 = vsel %vm285, %v537, %v539
      %541 = vrot.lane.b32.xlu0 %v538, 112
      %v542 = vpop.permute.xlu0 %541
      %543 = vrot.lane.b32.xlu0 %v540, 112
      %v544 = vpop.permute.xlu0 %543
      %v547 = vrot.slane %v481, 2
      %v548 = vrot.slane %v482, 2
      %v549 = vsel %vm297, %v547, %v548
      %v550 = vrot.slane %v483, 2
      %v551 = vsel %vm297, %v548, %v550
      %v552 = vsel %vm365, %v391, %v485
      %v553 = vsel %vm365, %v392, %v487
      %v554 = vsel %vm368, %v552, %v491
      %v555 = vsel %vm368, %v553, %v493
      %v556 = vsel %vm371, %v554, %v499
      %v557 = vsel %vm371, %v555, %v501
      %v558 = vsel %vm374, %v556, %v511
      %v559 = vsel %vm374, %v557, %v513
      %v560 = vsel %vm377, %v558, %v522
      %v561 = vsel %vm377, %v559, %v524
      %v562 = vsel %vm380, %v560, %v530
      %v563 = vsel %vm380, %v561, %v532
      %v564 = vsel %vm383, %v562, %v542
      %v565 = vsel %vm383, %v563, %v544
      %s566 = scalar_lea.vmem %s246, 168
      %v567 = vld [vmem:[%s566] sm:$0xff]
      %v568 = vld [vmem:[%s566 + $0x8] sm:$0xff]
      %v569 = vld [vmem:[%s566 + $0x10] sm:$0x3]
      %s570 = scalar_lea.vmem %s246, 192
      %v571 = vld [vmem:[%s570] sm:$0xff]
      %v572 = vld [vmem:[%s570 + $0x8] sm:$0xff]
      %v573 = vld [vmem:[%s570 + $0x10] sm:$0x3]
      %574 = vrot.lane.b32.xlu0 %v538, 16
      %v575 = vpop.permute.xlu0 %574
      %576 = vrot.lane.b32.xlu0 %v540, 16
      %v577 = vpop.permute.xlu0 %576
      %580 = vrot.lane.b32.xlu0 %v549, 32
      %v581 = vpop.permute.xlu0 %580
      %582 = vrot.lane.b32.xlu0 %v551, 32
      %v583 = vpop.permute.xlu0 %582
      %588 = vrot.lane.b32.xlu0 %v567, 48
      %v589 = vpop.permute.xlu0 %588
      %590 = vrot.lane.b32.xlu0 %v568, 48
      %v591 = vpop.permute.xlu0 %590
      %v595 = vrot.slane %v567, 1
      %v596 = vrot.slane %v568, 1
      %v597 = vsel %vm285, %v595, %v596
      %v598 = vrot.slane %v569, 1
      %v599 = vsel %vm285, %v596, %v598
      %600 = vrot.lane.b32.xlu0 %v597, 64
      %v601 = vpop.permute.xlu0 %600
      %602 = vrot.lane.b32.xlu0 %v599, 64
      %v603 = vpop.permute.xlu0 %602
      %v606 = vrot.slane %v567, 2
      %v607 = vrot.slane %v568, 2
      %v608 = vsel %vm297, %v606, %v607
      %v609 = vrot.slane %v569, 2
      %v610 = vsel %vm297, %v607, %v609
      %611 = vrot.lane.b32.xlu0 %v608, 80
      %v612 = vpop.permute.xlu0 %611
      %613 = vrot.lane.b32.xlu0 %v610, 80
      %v614 = vpop.permute.xlu0 %613
      %619 = vrot.lane.b32.xlu0 %v571, 96
      %v620 = vpop.permute.xlu0 %619
      %621 = vrot.lane.b32.xlu0 %v572, 96
      %v622 = vpop.permute.xlu0 %621
      %v626 = vrot.slane %v571, 1
      %v627 = vrot.slane %v572, 1
      %v628 = vsel %vm285, %v626, %v627
      %v629 = vrot.slane %v573, 1
      %v630 = vsel %vm285, %v627, %v629
      %631 = vrot.lane.b32.xlu0 %v628, 112
      %v632 = vpop.permute.xlu0 %631
      %633 = vrot.lane.b32.xlu0 %v630, 112
      %v634 = vpop.permute.xlu0 %633
      %v637 = vrot.slane %v571, 2
      %v638 = vrot.slane %v572, 2
      %v639 = vsel %vm297, %v637, %v638
      %v640 = vrot.slane %v573, 2
      %v641 = vsel %vm297, %v638, %v640
      %v642 = vsel %vm365, %v481, %v575
      %v643 = vsel %vm365, %v482, %v577
      %v644 = vsel %vm368, %v642, %v581
      %v645 = vsel %vm368, %v643, %v583
      %v646 = vsel %vm371, %v644, %v589
      %v647 = vsel %vm371, %v645, %v591
      %v648 = vsel %vm374, %v646, %v601
      %v649 = vsel %vm374, %v647, %v603
      %v650 = vsel %vm377, %v648, %v612
      %v651 = vsel %vm377, %v649, %v614
      %v652 = vsel %vm380, %v650, %v620
      %v653 = vsel %vm380, %v651, %v622
      %v654 = vsel %vm383, %v652, %v632
      %v655 = vsel %vm383, %v653, %v634
      %s656 = scalar_lea.vmem %s246, 216
      %v657 = vld [vmem:[%s656] sm:$0xff]
      %v658 = vld [vmem:[%s656 + $0x8] sm:$0xff]
      %v659 = vld [vmem:[%s656 + $0x10] sm:$0x3]
      %s660 = scalar_lea.vmem %s246, 240
      %v661 = vld [vmem:[%s660] sm:$0xff]
      %v662 = vld [vmem:[%s660 + $0x8] sm:$0xff]
      %v663 = vld [vmem:[%s660 + $0x10] sm:$0x3]
      %664 = vrot.lane.b32.xlu0 %v628, 16
      %v665 = vpop.permute.xlu0 %664
      %666 = vrot.lane.b32.xlu0 %v630, 16
      %v667 = vpop.permute.xlu0 %666
      %670 = vrot.lane.b32.xlu0 %v639, 32
      %v671 = vpop.permute.xlu0 %670
      %672 = vrot.lane.b32.xlu0 %v641, 32
      %v673 = vpop.permute.xlu0 %672
      %678 = vrot.lane.b32.xlu0 %v657, 48
      %v679 = vpop.permute.xlu0 %678
      %680 = vrot.lane.b32.xlu0 %v658, 48
      %v681 = vpop.permute.xlu0 %680
      %v685 = vrot.slane %v657, 1
      %v686 = vrot.slane %v658, 1
      %v687 = vsel %vm285, %v685, %v686
      %v688 = vrot.slane %v659, 1
      %v689 = vsel %vm285, %v686, %v688
      %690 = vrot.lane.b32.xlu0 %v687, 64
      %v691 = vpop.permute.xlu0 %690
      %692 = vrot.lane.b32.xlu0 %v689, 64
      %v693 = vpop.permute.xlu0 %692
      %v696 = vrot.slane %v657, 2
      %v697 = vrot.slane %v658, 2
      %v698 = vsel %vm297, %v696, %v697
      %v699 = vrot.slane %v659, 2
      %v700 = vsel %vm297, %v697, %v699
      %701 = vrot.lane.b32.xlu0 %v698, 80
      %v702 = vpop.permute.xlu0 %701
      %703 = vrot.lane.b32.xlu0 %v700, 80
      %v704 = vpop.permute.xlu0 %703
      %709 = vrot.lane.b32.xlu0 %v661, 96
      %v710 = vpop.permute.xlu0 %709
      %711 = vrot.lane.b32.xlu0 %v662, 96
      %v712 = vpop.permute.xlu0 %711
      %v716 = vrot.slane %v661, 1
      %v717 = vrot.slane %v662, 1
      %v718 = vsel %vm285, %v716, %v717
      %v719 = vrot.slane %v663, 1
      %v720 = vsel %vm285, %v717, %v719
      %721 = vrot.lane.b32.xlu0 %v718, 112
      %v722 = vpop.permute.xlu0 %721
      %723 = vrot.lane.b32.xlu0 %v720, 112
      %v724 = vpop.permute.xlu0 %723
      %v727 = vrot.slane %v661, 2
      %v728 = vrot.slane %v662, 2
      %v729 = vsel %vm297, %v727, %v728
      %v730 = vrot.slane %v663, 2
      %v731 = vsel %vm297, %v728, %v730
      %v732 = vsel %vm365, %v571, %v665
      %v733 = vsel %vm365, %v572, %v667
      %v734 = vsel %vm368, %v732, %v671
      %v735 = vsel %vm368, %v733, %v673
      %v736 = vsel %vm371, %v734, %v679
      %v737 = vsel %vm371, %v735, %v681
      %v738 = vsel %vm374, %v736, %v691
      %v739 = vsel %vm374, %v737, %v693
      %v740 = vsel %vm377, %v738, %v702
      %v741 = vsel %vm377, %v739, %v704
      %v742 = vsel %vm380, %v740, %v710
      %v743 = vsel %vm380, %v741, %v712
      %v744 = vsel %vm383, %v742, %v722
      %v745 = vsel %vm383, %v743, %v724
      %s746 = scalar_lea.vmem %s246, 264
      %v747 = vld [vmem:[%s746] sm:$0xff]
      %v748 = vld [vmem:[%s746 + $0x8] sm:$0xff]
      %v749 = vld [vmem:[%s746 + $0x10] sm:$0x3]
      %s750 = scalar_lea.vmem %s246, 288
      %v751 = vld [vmem:[%s750] sm:$0xff]
      %v752 = vld [vmem:[%s750 + $0x8] sm:$0xff]
      %v753 = vld [vmem:[%s750 + $0x10] sm:$0x3]
      %754 = vrot.lane.b32.xlu0 %v718, 16
      %v755 = vpop.permute.xlu0 %754
      %756 = vrot.lane.b32.xlu0 %v720, 16
      %v757 = vpop.permute.xlu0 %756
      %760 = vrot.lane.b32.xlu0 %v729, 32
      %v761 = vpop.permute.xlu0 %760
      %762 = vrot.lane.b32.xlu0 %v731, 32
      %v763 = vpop.permute.xlu0 %762
      %768 = vrot.lane.b32.xlu0 %v747, 48
      %v769 = vpop.permute.xlu0 %768
      %770 = vrot.lane.b32.xlu0 %v748, 48
      %v771 = vpop.permute.xlu0 %770
      %v775 = vrot.slane %v747, 1
      %v776 = vrot.slane %v748, 1
      %v777 = vsel %vm285, %v775, %v776
      %v778 = vrot.slane %v749, 1
      %v779 = vsel %vm285, %v776, %v778
      %780 = vrot.lane.b32.xlu0 %v777, 64
      %v781 = vpop.permute.xlu0 %780
      %782 = vrot.lane.b32.xlu0 %v779, 64
      %v783 = vpop.permute.xlu0 %782
      %v786 = vrot.slane %v747, 2
      %v787 = vrot.slane %v748, 2
      %v788 = vsel %vm297, %v786, %v787
      %v789 = vrot.slane %v749, 2
      %v790 = vsel %vm297, %v787, %v789
      %791 = vrot.lane.b32.xlu0 %v788, 80
      %v792 = vpop.permute.xlu0 %791
      %793 = vrot.lane.b32.xlu0 %v790, 80
      %v794 = vpop.permute.xlu0 %793
      %799 = vrot.lane.b32.xlu0 %v751, 96
      %v800 = vpop.permute.xlu0 %799
      %801 = vrot.lane.b32.xlu0 %v752, 96
      %v802 = vpop.permute.xlu0 %801
      %v806 = vrot.slane %v751, 1
      %v807 = vrot.slane %v752, 1
      %v808 = vsel %vm285, %v806, %v807
      %v809 = vrot.slane %v753, 1
      %v810 = vsel %vm285, %v807, %v809
      %811 = vrot.lane.b32.xlu0 %v808, 112
      %v812 = vpop.permute.xlu0 %811
      %813 = vrot.lane.b32.xlu0 %v810, 112
      %v814 = vpop.permute.xlu0 %813
      %v817 = vrot.slane %v751, 2
      %v818 = vrot.slane %v752, 2
      %v819 = vsel %vm297, %v817, %v818
      %v820 = vrot.slane %v753, 2
      %v821 = vsel %vm297, %v818, %v820
      %v822 = vsel %vm365, %v661, %v755
      %v823 = vsel %vm365, %v662, %v757
      %v824 = vsel %vm368, %v822, %v761
      %v825 = vsel %vm368, %v823, %v763
      %v826 = vsel %vm371, %v824, %v769
      %v827 = vsel %vm371, %v825, %v771
      %v828 = vsel %vm374, %v826, %v781
      %v829 = vsel %vm374, %v827, %v783
      %v830 = vsel %vm377, %v828, %v792
      %v831 = vsel %vm377, %v829, %v794
      %v832 = vsel %vm380, %v830, %v800
      %v833 = vsel %vm380, %v831, %v802
      %v834 = vsel %vm383, %v832, %v812
      %v835 = vsel %vm383, %v833, %v814
      %s836 = scalar_lea.vmem %s246, 312
      %v837 = vld [vmem:[%s836] sm:$0xff]
      %v838 = vld [vmem:[%s836 + $0x8] sm:$0xff]
      %v839 = vld [vmem:[%s836 + $0x10] sm:$0x3]
      %s840 = scalar_lea.vmem %s246, 336
      %v841 = vld [vmem:[%s840] sm:$0xff]
      %v842 = vld [vmem:[%s840 + $0x8] sm:$0xff]
      %v843 = vld [vmem:[%s840 + $0x10] sm:$0x3]
      %844 = vrot.lane.b32.xlu0 %v808, 16
      %v845 = vpop.permute.xlu0 %844
      %846 = vrot.lane.b32.xlu0 %v810, 16
      %v847 = vpop.permute.xlu0 %846
      %850 = vrot.lane.b32.xlu0 %v819, 32
      %v851 = vpop.permute.xlu0 %850
      %852 = vrot.lane.b32.xlu0 %v821, 32
      %v853 = vpop.permute.xlu0 %852
      %858 = vrot.lane.b32.xlu0 %v837, 48
      %v859 = vpop.permute.xlu0 %858
      %860 = vrot.lane.b32.xlu0 %v838, 48
      %v861 = vpop.permute.xlu0 %860
      %v865 = vrot.slane %v837, 1
      %v866 = vrot.slane %v838, 1
      %v867 = vsel %vm285, %v865, %v866
      %v868 = vrot.slane %v839, 1
      %v869 = vsel %vm285, %v866, %v868
      %870 = vrot.lane.b32.xlu0 %v867, 64
      %v871 = vpop.permute.xlu0 %870
      %872 = vrot.lane.b32.xlu0 %v869, 64
      %v873 = vpop.permute.xlu0 %872
      %v876 = vrot.slane %v837, 2
      %v877 = vrot.slane %v838, 2
      %v878 = vsel %vm297, %v876, %v877
      %v879 = vrot.slane %v839, 2
      %v880 = vsel %vm297, %v877, %v879
      %881 = vrot.lane.b32.xlu0 %v878, 80
      %v882 = vpop.permute.xlu0 %881
      %883 = vrot.lane.b32.xlu0 %v880, 80
      %v884 = vpop.permute.xlu0 %883
      %889 = vrot.lane.b32.xlu0 %v841, 96
      %v890 = vpop.permute.xlu0 %889
      %891 = vrot.lane.b32.xlu0 %v842, 96
      %v892 = vpop.permute.xlu0 %891
      %v896 = vrot.slane %v841, 1
      %v897 = vrot.slane %v842, 1
      %v898 = vsel %vm285, %v896, %v897
      %v899 = vrot.slane %v843, 1
      %v900 = vsel %vm285, %v897, %v899
      %901 = vrot.lane.b32.xlu0 %v898, 112
      %v902 = vpop.permute.xlu0 %901
      %903 = vrot.lane.b32.xlu0 %v900, 112
      %v904 = vpop.permute.xlu0 %903
      %v907 = vrot.slane %v841, 2
      %v908 = vrot.slane %v842, 2
      %v909 = vsel %vm297, %v907, %v908
      %v910 = vrot.slane %v843, 2
      %v911 = vsel %vm297, %v908, %v910
      %v912 = vsel %vm365, %v751, %v845
      %v913 = vsel %vm365, %v752, %v847
      %v914 = vsel %vm368, %v912, %v851
      %v915 = vsel %vm368, %v913, %v853
      %v916 = vsel %vm371, %v914, %v859
      %v917 = vsel %vm371, %v915, %v861
      %v918 = vsel %vm374, %v916, %v871
      %v919 = vsel %vm374, %v917, %v873
      %v920 = vsel %vm377, %v918, %v882
      %v921 = vsel %vm377, %v919, %v884
      %v922 = vsel %vm380, %v920, %v890
      %v923 = vsel %vm380, %v921, %v892
      %v924 = vsel %vm383, %v922, %v902
      %v925 = vsel %vm383, %v923, %v904
      %s926 = scalar_lea.vmem %s246, 360
      %v927 = vld [vmem:[%s926] sm:$0xff]
      %v928 = vld [vmem:[%s926 + $0x8] sm:$0xff]
      %v929 = vld [vmem:[%s926 + $0x10] sm:$0x3]
      %s930 = scalar_lea.vmem %s246, 384
      %v931 = vld [vmem:[%s930] sm:$0xff]
      %v932 = vld [vmem:[%s930 + $0x8] sm:$0xff]
      %v933 = vld [vmem:[%s930 + $0x10] sm:$0x3]
      %934 = vrot.lane.b32.xlu0 %v898, 16
      %v935 = vpop.permute.xlu0 %934
      %936 = vrot.lane.b32.xlu0 %v900, 16
      %v937 = vpop.permute.xlu0 %936
      %940 = vrot.lane.b32.xlu0 %v909, 32
      %v941 = vpop.permute.xlu0 %940
      %942 = vrot.lane.b32.xlu0 %v911, 32
      %v943 = vpop.permute.xlu0 %942
      %948 = vrot.lane.b32.xlu0 %v927, 48
      %v949 = vpop.permute.xlu0 %948
      %950 = vrot.lane.b32.xlu0 %v928, 48
      %v951 = vpop.permute.xlu0 %950
      %v955 = vrot.slane %v927, 1
      %v956 = vrot.slane %v928, 1
      %v957 = vsel %vm285, %v955, %v956
      %v958 = vrot.slane %v929, 1
      %v959 = vsel %vm285, %v956, %v958
      %960 = vrot.lane.b32.xlu0 %v957, 64
      %v961 = vpop.permute.xlu0 %960
      %962 = vrot.lane.b32.xlu0 %v959, 64
      %v963 = vpop.permute.xlu0 %962
      %v966 = vrot.slane %v927, 2
      %v967 = vrot.slane %v928, 2
      %v968 = vsel %vm297, %v966, %v967
      %v969 = vrot.slane %v929, 2
      %v970 = vsel %vm297, %v967, %v969
      %971 = vrot.lane.b32.xlu0 %v968, 80
      %v972 = vpop.permute.xlu0 %971
      %973 = vrot.lane.b32.xlu0 %v970, 80
      %v974 = vpop.permute.xlu0 %973
      %979 = vrot.lane.b32.xlu0 %v931, 96
      %v980 = vpop.permute.xlu0 %979
      %981 = vrot.lane.b32.xlu0 %v932, 96
      %v982 = vpop.permute.xlu0 %981
      %v986 = vrot.slane %v931, 1
      %v987 = vrot.slane %v932, 1
      %v988 = vsel %vm285, %v986, %v987
      %v989 = vrot.slane %v933, 1
      %v990 = vsel %vm285, %v987, %v989
      %991 = vrot.lane.b32.xlu0 %v988, 112
      %v992 = vpop.permute.xlu0 %991
      %993 = vrot.lane.b32.xlu0 %v990, 112
      %v994 = vpop.permute.xlu0 %993
      %v997 = vrot.slane %v931, 2
      %v998 = vrot.slane %v932, 2
      %v999 = vsel %vm297, %v997, %v998
      %v1000 = vrot.slane %v933, 2
      %v1001 = vsel %vm297, %v998, %v1000
      %v1002 = vsel %vm365, %v841, %v935
      %v1003 = vsel %vm365, %v842, %v937
      %v1004 = vsel %vm368, %v1002, %v941
      %v1005 = vsel %vm368, %v1003, %v943
      %v1006 = vsel %vm371, %v1004, %v949
      %v1007 = vsel %vm371, %v1005, %v951
      %v1008 = vsel %vm374, %v1006, %v961
      %v1009 = vsel %vm374, %v1007, %v963
      %v1010 = vsel %vm377, %v1008, %v972
      %v1011 = vsel %vm377, %v1009, %v974
      %v1012 = vsel %vm380, %v1010, %v980
      %v1013 = vsel %vm380, %v1011, %v982
      %v1014 = vsel %vm383, %v1012, %v992
      %v1015 = vsel %vm383, %v1013, %v994
      %v1017 = vlaneseq
      %v1018 = vshrl.u32 %v1017, 7
      %v1019 = vsub.s32 0, %v1018
      %v1020 = vrot.slane %v270, %v1019
      %v1022 = vsel %vm365, %v362, 0
      %v1024 = vsel %vm365, %v364, 0
      %v1026 = vsel %vm365, %v459, 0
      %v1028 = vsel %vm365, %v461, 0
      %v1030 = vsel %vm365, %v549, 0
      %v1032 = vsel %vm365, %v551, 0
      %v1034 = vsel %vm365, %v639, 0
      %v1036 = vsel %vm365, %v641, 0
      %v1038 = vsel %vm365, %v729, 0
      %v1040 = vsel %vm365, %v731, 0
      %v1042 = vsel %vm365, %v819, 0
      %v1044 = vsel %vm365, %v821, 0
      %v1046 = vsel %vm365, %v909, 0
      %v1048 = vsel %vm365, %v911, 0
      %v1050 = vsel %vm365, %v999, 0
      %v1052 = vsel %vm365, %v1001, 0
      %1054 = vmatprep.subr.mxu0 0.0
      %1055 = vmatpush1.msra.mxu0 %v252
      %1056 = vmatprep.subr.mxu0 0.0
      %1057 = vmatpush1.msra.mxu0 %v253
      %1058 = vmatprep.subr.mxu0 0.0
      %1059 = vmatpush1.msra.mxu0 %v254
      %1060 = vmatprep.subr.mxu0 0.0
      %1061 = vmatpush1.msra.mxu0 %v255
      %1062 = vmatprep.subr.mxu0 0.0
      %1063 = vmatpush1.msra.mxu0 %v256
      %1064 = vmatprep.subr.mxu0 0.0
      %1065 = vmatpush1.msra.mxu0 %v257
      %1066 = vmatprep.subr.mxu0 0.0
      %1067 = vmatpush1.msra.mxu0 %v258
      %1068 = vmatprep.subr.mxu0 0.0
      %1069 = vmatpush1.msra.mxu0 %v259
      %1070 = vmatprep.subr.mxu0 0.0
      %1071 = vmatpush1.msra.mxu0 %v260
      %1072 = vmatprep.subr.mxu0 0.0
      %1073 = vmatpush1.msra.mxu0 %v261
      %1074 = vmatprep.subr.mxu0 0.0
      %1075 = vmatpush1.msra.mxu0 %v262
      %1076 = vmatprep.subr.mxu0 0.0
      %1077 = vmatpush1.msra.mxu0 %v263
      %1078 = vmatprep.subr.mxu0 0.0
      %1079 = vmatpush1.msra.mxu0 %v264
      %1080 = vmatprep.subr.mxu0 0.0
      %1081 = vmatpush1.msra.mxu0 %v265
      %1082 = vmatprep.subr.mxu0 0.0
      %1083 = vmatpush1.msra.mxu0 %v266
      %1084 = vmatprep.subr.mxu0 0.0
      %1085 = vmatpush1.msra.mxu0 %v267
      %1086 = vmatprep.subr.mxu0 0.0
      %1087 = vmatpush1.msra.mxu0 %v268
      %1088 = vmatprep.subr.mxu0 0.0
      %1089 = vmatpush1.msra.mxu0 %v269
      %1090 = vmatprep.subr.mxu0 0.0
      %1091 = vmatpush1.msra.mxu0 0.0
      %1092 = vmatprep.subr.mxu0 0.0
      %1093 = vmatpush1.msra.mxu0 0.0
      %1094 = vmatprep.subr.mxu0 0.0
      %1095 = vmatpush1.msra.mxu0 0.0
      %1096 = vmatprep.subr.mxu0 0.0
      %1097 = vmatpush1.msra.mxu0 0.0
      %1098 = vmatprep.subr.mxu0 0.0
      %1099 = vmatpush1.msra.mxu0 0.0
      %1100 = vmatprep.subr.mxu0 0.0
      %1101 = vmatpush1.msra.mxu0 0.0
      %1102 = vmatprep.subr.mxu0 0.0
      %1103 = vmatpush1.msra.mxu0 0.0
      %1104 = vmatprep.subr.mxu0 0.0
      %1105 = vmatpush1.msra.mxu0 0.0
      %1106 = vmatprep.subr.mxu0 0.0
      %1107 = vmatpush1.msra.mxu0 0.0
      %1108 = vmatprep.subr.mxu0 0.0
      %1109 = vmatpush1.msra.mxu0 0.0
      %1110 = vmatprep.subr.mxu0 0.0
      %1111 = vmatpush1.msra.mxu0 0.0
      %1112 = vmatprep.subr.mxu0 0.0
      %1113 = vmatpush1.msra.mxu0 0.0
      %1114 = vmatprep.subr.mxu0 0.0
      %1115 = vmatpush1.msra.mxu0 0.0
      %1116 = vmatprep.subr.mxu0 0.0
      %1117 = vmatpush1.msra.mxu0 0.0
      %1118 = vmatprep.mubr.f32.mxu0 %v1022
      %1119 = vmatmul.mubr.f32.gmra.mrb[0].mxu0 %v384
      %v1120 = vpop.f32.mrb[0].mxu0
      %v1121 = vadd.f32 %v1020, %v1120
      %v1122 = vpop.f32.mrb[0].mxu0
      %1123 = vmatprep.mubr.f32.mxu0 %v1024
      %1124 = vmatmul.mubr.f32.gmra.mrb[0].mxu0 %v385
      %v1125 = vpop.f32.mrb[0].mxu0
      %v1126 = vadd.f32 %v1020, %v1125
      %v1127 = vpop.f32.mrb[0].mxu0
      %1128 = vmatprep.mubr.f32.mxu0 %v1026
      %1129 = vmatmul.mubr.f32.gmra.mrb[0].mxu0 %v474
      %v1130 = vpop.f32.mrb[0].mxu0
      %v1131 = vadd.f32 %v1020, %v1130
      %v1132 = vpop.f32.mrb[0].mxu0
      %1133 = vmatprep.mubr.f32.mxu0 %v1028
      %1134 = vmatmul.mubr.f32.gmra.mrb[0].mxu0 %v475
      %v1135 = vpop.f32.mrb[0].mxu0
      %v1136 = vadd.f32 %v1020, %v1135
      %v1137 = vpop.f32.mrb[0].mxu0
      %1138 = vmatprep.mubr.f32.mxu0 %v1030
      %1139 = vmatmul.mubr.f32.gmra.mrb[0].mxu0 %v564
      %v1140 = vpop.f32.mrb[0].mxu0
      %v1141 = vadd.f32 %v1020, %v1140
      %v1142 = vpop.f32.mrb[0].mxu0
      %1143 = vmatprep.mubr.f32.mxu0 %v1032
      %1144 = vmatmul.mubr.f32.gmra.mrb[0].mxu0 %v565
      %v1145 = vpop.f32.mrb[0].mxu0
      %v1146 = vadd.f32 %v1020, %v1145
      %v1147 = vpop.f32.mrb[0].mxu0
      %1148 = vmatprep.mubr.f32.mxu0 %v1034
      %1149 = vmatmul.mubr.f32.gmra.mrb[0].mxu0 %v654
      %v1150 = vpop.f32.mrb[0].mxu0
      %v1151 = vadd.f32 %v1020, %v1150
      %v1152 = vpop.f32.mrb[0].mxu0
      %1153 = vmatprep.mubr.f32.mxu0 %v1036
      %1154 = vmatmul.mubr.f32.gmra.mrb[0].mxu0 %v655
      %v1155 = vpop.f32.mrb[0].mxu0
      %v1156 = vadd.f32 %v1020, %v1155
      %v1157 = vpop.f32.mrb[0].mxu0
      %1158 = vmatprep.mubr.f32.mxu0 %v1038
      %1159 = vmatmul.mubr.f32.gmra.mrb[0].mxu0 %v744
      %v1160 = vpop.f32.mrb[0].mxu0
      %v1161 = vadd.f32 %v1020, %v1160
      %v1162 = vpop.f32.mrb[0].mxu0
      %1163 = vmatprep.mubr.f32.mxu0 %v1040
      %1164 = vmatmul.mubr.f32.gmra.mrb[0].mxu0 %v745
      %v1165 = vpop.f32.mrb[0].mxu0
      %v1166 = vadd.f32 %v1020, %v1165
      %v1167 = vpop.f32.mrb[0].mxu0
      %1168 = vmatprep.mubr.f32.mxu0 %v1042
      %1169 = vmatmul.mubr.f32.gmra.mrb[0].mxu0 %v834
      %v1170 = vpop.f32.mrb[0].mxu0
      %v1171 = vadd.f32 %v1020, %v1170
      %v1172 = vpop.f32.mrb[0].mxu0
      %1173 = vmatprep.mubr.f32.mxu0 %v1044
      %1174 = vmatmul.mubr.f32.gmra.mrb[0].mxu0 %v835
      %v1175 = vpop.f32.mrb[0].mxu0
      %v1176 = vadd.f32 %v1020, %v1175
      %v1177 = vpop.f32.mrb[0].mxu0
      %1178 = vmatprep.mubr.f32.mxu0 %v1046
      %1179 = vmatmul.mubr.f32.gmra.mrb[0].mxu0 %v924
      %v1180 = vpop.f32.mrb[0].mxu0
      %v1181 = vadd.f32 %v1020, %v1180
      %v1182 = vpop.f32.mrb[0].mxu0
      %1183 = vmatprep.mubr.f32.mxu0 %v1048
      %1184 = vmatmul.mubr.f32.gmra.mrb[0].mxu0 %v925
      %v1185 = vpop.f32.mrb[0].mxu0
      %v1186 = vadd.f32 %v1020, %v1185
      %v1187 = vpop.f32.mrb[0].mxu0
      %1188 = vmatprep.mubr.f32.mxu0 %v1050
      %1189 = vmatmul.mubr.f32.gmra.mrb[0].mxu0 %v1014
      %v1190 = vpop.f32.mrb[0].mxu0
      %v1191 = vadd.f32 %v1020, %v1190
      %v1192 = vpop.f32.mrb[0].mxu0
      %1193 = vmatprep.mubr.f32.mxu0 %v1052
      %1194 = vmatmul.mubr.f32.gmra.mrb[0].mxu0 %v1015
      %v1195 = vpop.f32.mrb[0].mxu0
      %v1196 = vadd.f32 %v1020, %v1195
      %v1197 = vpop.f32.mrb[0].mxu0
      %1198 = vdwg.mxu0
      %v1199 = vmax.f32 %v1121, 0.0
      %v1200 = vmax.f32 %v1126, 0.0
      %v1201 = vmax.f32 %v1131, 0.0
      %v1202 = vmax.f32 %v1136, 0.0
      %v1203 = vmax.f32 %v1141, 0.0
      %v1204 = vmax.f32 %v1146, 0.0
      %v1205 = vmax.f32 %v1151, 0.0
      %v1206 = vmax.f32 %v1156, 0.0
      %v1207 = vmax.f32 %v1161, 0.0
      %v1208 = vmax.f32 %v1166, 0.0
      %v1209 = vmax.f32 %v1171, 0.0
      %v1210 = vmax.f32 %v1176, 0.0
      %v1211 = vmax.f32 %v1181, 0.0
      %v1212 = vmax.f32 %v1186, 0.0
      %v1213 = vmax.f32 %v1191, 0.0
      %v1214 = vmax.f32 %v1196, 0.0
      %1215 = vst.msk [vmem:[#allocation2] sm:$0xff] %vm365, 0.0
      %1216 = vst.msk [vmem:[#allocation2 + $0x8] sm:$0xff] %vm365, 0.0
      %vm1217 = vcmask 123904
      %1218 = vst.msk [vmem:[#allocation2 + $0x10] sm:$0x3] %vm1217, 0.0
      %1219 = vst.msk [vmem:[#allocation2 + $0x18] sm:$0xff] %vm365, 0.0
      %1220 = vst.msk [vmem:[#allocation2 + $0x20] sm:$0xff] %vm365, 0.0
      %1221 = vst.msk [vmem:[#allocation2 + $0x28] sm:$0x3] %vm1217, 0.0
      %1222 = vst.msk [vmem:[#allocation2 + $0x30] sm:$0xff] %vm365, 0.0
      %1223 = vst.msk [vmem:[#allocation2 + $0x38] sm:$0xff] %vm365, 0.0
      %1224 = vst.msk [vmem:[#allocation2 + $0x40] sm:$0x3] %vm1217, 0.0
      %1225 = vst.msk [vmem:[#allocation2 + $0x48] sm:$0xff] %vm365, 0.0
      %1226 = vst.msk [vmem:[#allocation2 + $0x50] sm:$0xff] %vm365, 0.0
      %1227 = vst.msk [vmem:[#allocation2 + $0x58] sm:$0x3] %vm1217, 0.0
      %1228 = vst.msk [vmem:[#allocation2 + $0x60] sm:$0xff] %vm365, 0.0
      %1229 = vst.msk [vmem:[#allocation2 + $0x68] sm:$0xff] %vm365, 0.0
      %1230 = vst.msk [vmem:[#allocation2 + $0x70] sm:$0x3] %vm1217, 0.0
      %1231 = vst.msk [vmem:[#allocation2 + $0x78] sm:$0xff] %vm365, 0.0
      %1232 = vst.msk [vmem:[#allocation2 + $0x80] sm:$0xff] %vm365, 0.0
      %1233 = vst.msk [vmem:[#allocation2 + $0x88] sm:$0x3] %vm1217, 0.0
      %1234 = vst.msk [vmem:[#allocation2 + $0x90] sm:$0xff] %vm365, 0.0
      %1235 = vst.msk [vmem:[#allocation2 + $0x98] sm:$0xff] %vm365, 0.0
      %1236 = vst.msk [vmem:[#allocation2 + $0xa0] sm:$0x3] %vm1217, 0.0
      %1237 = vst.msk [vmem:[#allocation2 + $0xa8] sm:$0xff] %vm365, 0.0
      %1238 = vst.msk [vmem:[#allocation2 + $0xb0] sm:$0xff] %vm365, 0.0
      %1239 = vst.msk [vmem:[#allocation2 + $0xb8] sm:$0x3] %vm1217, 0.0
      %1240 = vst.msk [vmem:[#allocation2 + $0xc0] sm:$0xff] %vm365, 0.0
      %1241 = vst.msk [vmem:[#allocation2 + $0xc8] sm:$0xff] %vm365, 0.0
      %1242 = vst.msk [vmem:[#allocation2 + $0xd0] sm:$0x3] %vm1217, 0.0
      %1243 = vst.msk [vmem:[#allocation2 + $0xd8] sm:$0xff] %vm365, 0.0
      %1244 = vst.msk [vmem:[#allocation2 + $0xe0] sm:$0xff] %vm365, 0.0
      %1245 = vst.msk [vmem:[#allocation2 + $0xe8] sm:$0x3] %vm1217, 0.0
      %s1246 = scalar_lea.vmem [#allocation2], 24
      %1247 = vst.msk [vmem:[%s1246 + $0x1] sm:$0xff] %vm365, %v1199
      %1248 = vst.msk [vmem:[%s1246 + $0x9] sm:$0xff] %vm365, %v1200
      %s1249 = scalar_lea.vmem [#allocation2], 48
      %1250 = vst.msk [vmem:[%s1249 + $0x1] sm:$0xff] %vm365, %v1201
      %1251 = vst.msk [vmem:[%s1249 + $0x9] sm:$0xff] %vm365, %v1202
      %s1252 = scalar_lea.vmem [#allocation2], 72
      %1253 = vst.msk [vmem:[%s1252 + $0x1] sm:$0xff] %vm365, %v1203
      %1254 = vst.msk [vmem:[%s1252 + $0x9] sm:$0xff] %vm365, %v1204
      %s1255 = scalar_lea.vmem [#allocation2], 96
      %1256 = vst.msk [vmem:[%s1255 + $0x1] sm:$0xff] %vm365, %v1205
      %1257 = vst.msk [vmem:[%s1255 + $0x9] sm:$0xff] %vm365, %v1206
      %s1258 = scalar_lea.vmem [#allocation2], 120
      %1259 = vst.msk [vmem:[%s1258 + $0x1] sm:$0xff] %vm365, %v1207
      %1260 = vst.msk [vmem:[%s1258 + $0x9] sm:$0xff] %vm365, %v1208
      %s1261 = scalar_lea.vmem [#allocation2], 144
      %1262 = vst.msk [vmem:[%s1261 + $0x1] sm:$0xff] %vm365, %v1209
      %1263 = vst.msk [vmem:[%s1261 + $0x9] sm:$0xff] %vm365, %v1210
      %s1264 = scalar_lea.vmem [#allocation2], 168
      %1265 = vst.msk [vmem:[%s1264 + $0x1] sm:$0xff] %vm365, %v1211
      %1266 = vst.msk [vmem:[%s1264 + $0x9] sm:$0xff] %vm365, %v1212
      %s1267 = scalar_lea.vmem [#allocation2], 192
      %1268 = vst.msk [vmem:[%s1267 + $0x1] sm:$0xff] %vm365, %v1213
      %1269 = vst.msk [vmem:[%s1267 + $0x9] sm:$0xff] %vm365, %v1214
      %v1270 = vld [vmem:[%s3] sm:$0xff]
      %v1271 = vld [vmem:[%s3 + $0x8] sm:$0xff]
      %v1272 = vld [vmem:[%s3 + $0x10] sm:$0xff]
      %v1273 = vld [vmem:[%s3 + $0x18] sm:$0xff]
      %v1274 = vld [vmem:[%s3 + $0x20] sm:$0xff]
      %v1275 = vld [vmem:[%s3 + $0x28] sm:$0xff]
      %v1276 = vld [vmem:[%s3 + $0x30] sm:$0xff]
      %v1277 = vld [vmem:[%s3 + $0x38] sm:$0xff]
      %v1278 = vld [vmem:[%s3 + $0x40] sm:$0xff]
      %v1279 = vld [vmem:[%s3 + $0x48] sm:$0xff]
      %v1280 = vld [vmem:[%s3 + $0x50] sm:$0xff]
      %v1281 = vld [vmem:[%s3 + $0x58] sm:$0xff]
      %v1282 = vld [vmem:[%s3 + $0x60] sm:$0xff]
      %v1283 = vld [vmem:[%s3 + $0x68] sm:$0xff]
      %v1284 = vld [vmem:[%s3 + $0x70] sm:$0xff]
      %v1285 = vld [vmem:[%s3 + $0x78] sm:$0xff]
      %v1286 = vld [vmem:[%s3 + $0x80] sm:$0xff]
      %v1287 = vld [vmem:[%s3 + $0x88] sm:$0xff]
      %v1288 = vld [vmem:[%s4] sm:$0x1]
      %v1289 = vld [vmem:[#allocation2] sm:$0xff]
      %v1290 = vld [vmem:[#allocation2 + $0x8] sm:$0xff]
      %v1291 = vld [vmem:[#allocation2 + $0x10] sm:$0x3]
      %v1292 = vld [vmem:[%s1246] sm:$0xff]
      %v1293 = vld [vmem:[%s1246 + $0x8] sm:$0xff]
      %v1294 = vld [vmem:[%s1246 + $0x10] sm:$0x3]
      %v1295 = vld [vmem:[%s1249] sm:$0xff]
      %v1296 = vld [vmem:[%s1249 + $0x8] sm:$0xff]
      %v1297 = vld [vmem:[%s1249 + $0x10] sm:$0x3]
      %v1301 = vrot.slane %v1289, 1
      %v1302 = vrot.slane %v1290, 1
      %v1303 = vsel %vm285, %v1301, %v1302
      %v1304 = vrot.slane %v1291, 1
      %v1305 = vsel %vm285, %v1302, %v1304
      %1306 = vrot.lane.b32.xlu0 %v1303, 16
      %v1307 = vpop.permute.xlu0 %1306
      %1308 = vrot.lane.b32.xlu0 %v1305, 16
      %v1309 = vpop.permute.xlu0 %1308
      %v1312 = vrot.slane %v1289, 2
      %v1313 = vrot.slane %v1290, 2
      %v1314 = vsel %vm297, %v1312, %v1313
      %v1315 = vrot.slane %v1291, 2
      %v1316 = vsel %vm297, %v1313, %v1315
      %1317 = vrot.lane.b32.xlu0 %v1314, 32
      %v1318 = vpop.permute.xlu0 %1317
      %1319 = vrot.lane.b32.xlu0 %v1316, 32
      %v1320 = vpop.permute.xlu0 %1319
      %1325 = vrot.lane.b32.xlu0 %v1292, 48
      %v1326 = vpop.permute.xlu0 %1325
      %1327 = vrot.lane.b32.xlu0 %v1293, 48
      %v1328 = vpop.permute.xlu0 %1327
      %v1332 = vrot.slane %v1292, 1
      %v1333 = vrot.slane %v1293, 1
      %v1334 = vsel %vm285, %v1332, %v1333
      %v1335 = vrot.slane %v1294, 1
      %v1336 = vsel %vm285, %v1333, %v1335
      %1337 = vrot.lane.b32.xlu0 %v1334, 64
      %v1338 = vpop.permute.xlu0 %1337
      %1339 = vrot.lane.b32.xlu0 %v1336, 64
      %v1340 = vpop.permute.xlu0 %1339
      %v1343 = vrot.slane %v1292, 2
      %v1344 = vrot.slane %v1293, 2
      %v1345 = vsel %vm297, %v1343, %v1344
      %v1346 = vrot.slane %v1294, 2
      %v1347 = vsel %vm297, %v1344, %v1346
      %1348 = vrot.lane.b32.xlu0 %v1345, 80
      %v1349 = vpop.permute.xlu0 %1348
      %1350 = vrot.lane.b32.xlu0 %v1347, 80
      %v1351 = vpop.permute.xlu0 %1350
      %1356 = vrot.lane.b32.xlu0 %v1295, 96
      %v1357 = vpop.permute.xlu0 %1356
      %1358 = vrot.lane.b32.xlu0 %v1296, 96
      %v1359 = vpop.permute.xlu0 %1358
      %v1363 = vrot.slane %v1295, 1
      %v1364 = vrot.slane %v1296, 1
      %v1365 = vsel %vm285, %v1363, %v1364
      %v1366 = vrot.slane %v1297, 1
      %v1367 = vsel %vm285, %v1364, %v1366
      %1368 = vrot.lane.b32.xlu0 %v1365, 112
      %v1369 = vpop.permute.xlu0 %1368
      %1370 = vrot.lane.b32.xlu0 %v1367, 112
      %v1371 = vpop.permute.xlu0 %1370
      %v1374 = vrot.slane %v1295, 2
      %v1375 = vrot.slane %v1296, 2
      %v1376 = vsel %vm297, %v1374, %v1375
      %v1377 = vrot.slane %v1297, 2
      %v1378 = vsel %vm297, %v1375, %v1377
      %v1379 = vsel %vm365, %v1289, %v1307
      %v1380 = vsel %vm365, %v1290, %v1309
      %v1381 = vsel %vm368, %v1379, %v1318
      %v1382 = vsel %vm368, %v1380, %v1320
      %v1383 = vsel %vm371, %v1381, %v1326
      %v1384 = vsel %vm371, %v1382, %v1328
      %v1385 = vsel %vm374, %v1383, %v1338
      %v1386 = vsel %vm374, %v1384, %v1340
      %v1387 = vsel %vm377, %v1385, %v1349
      %v1388 = vsel %vm377, %v1386, %v1351
      %v1389 = vsel %vm380, %v1387, %v1357
      %v1390 = vsel %vm380, %v1388, %v1359
      %v1391 = vsel %vm383, %v1389, %v1369
      %v1392 = vsel %vm383, %v1390, %v1371
      %v1393 = vld [vmem:[%s1252] sm:$0xff]
      %v1394 = vld [vmem:[%s1252 + $0x8] sm:$0xff]
      %v1395 = vld [vmem:[%s1252 + $0x10] sm:$0x3]
      %v1396 = vld [vmem:[%s1255] sm:$0xff]
      %v1397 = vld [vmem:[%s1255 + $0x8] sm:$0xff]
      %v1398 = vld [vmem:[%s1255 + $0x10] sm:$0x3]
      %1399 = vrot.lane.b32.xlu0 %v1365, 16
      %v1400 = vpop.permute.xlu0 %1399
      %1401 = vrot.lane.b32.xlu0 %v1367, 16
      %v1402 = vpop.permute.xlu0 %1401
      %1405 = vrot.lane.b32.xlu0 %v1376, 32
      %v1406 = vpop.permute.xlu0 %1405
      %1407 = vrot.lane.b32.xlu0 %v1378, 32
      %v1408 = vpop.permute.xlu0 %1407
      %1413 = vrot.lane.b32.xlu0 %v1393, 48
      %v1414 = vpop.permute.xlu0 %1413
      %1415 = vrot.lane.b32.xlu0 %v1394, 48
      %v1416 = vpop.permute.xlu0 %1415
      %v1420 = vrot.slane %v1393, 1
      %v1421 = vrot.slane %v1394, 1
      %v1422 = vsel %vm285, %v1420, %v1421
      %v1423 = vrot.slane %v1395, 1
      %v1424 = vsel %vm285, %v1421, %v1423
      %1425 = vrot.lane.b32.xlu0 %v1422, 64
      %v1426 = vpop.permute.xlu0 %1425
      %1427 = vrot.lane.b32.xlu0 %v1424, 64
      %v1428 = vpop.permute.xlu0 %1427
      %v1431 = vrot.slane %v1393, 2
      %v1432 = vrot.slane %v1394, 2
      %v1433 = vsel %vm297, %v1431, %v1432
      %v1434 = vrot.slane %v1395, 2
      %v1435 = vsel %vm297, %v1432, %v1434
      %1436 = vrot.lane.b32.xlu0 %v1433, 80
      %v1437 = vpop.permute.xlu0 %1436
      %1438 = vrot.lane.b32.xlu0 %v1435, 80
      %v1439 = vpop.permute.xlu0 %1438
      %1444 = vrot.lane.b32.xlu0 %v1396, 96
      %v1445 = vpop.permute.xlu0 %1444
      %1446 = vrot.lane.b32.xlu0 %v1397, 96
      %v1447 = vpop.permute.xlu0 %1446
      %v1451 = vrot.slane %v1396, 1
      %v1452 = vrot.slane %v1397, 1
      %v1453 = vsel %vm285, %v1451, %v1452
      %v1454 = vrot.slane %v1398, 1
      %v1455 = vsel %vm285, %v1452, %v1454
      %1456 = vrot.lane.b32.xlu0 %v1453, 112
      %v1457 = vpop.permute.xlu0 %1456
      %1458 = vrot.lane.b32.xlu0 %v1455, 112
      %v1459 = vpop.permute.xlu0 %1458
      %v1462 = vrot.slane %v1396, 2
      %v1463 = vrot.slane %v1397, 2
      %v1464 = vsel %vm297, %v1462, %v1463
      %v1465 = vrot.slane %v1398, 2
      %v1466 = vsel %vm297, %v1463, %v1465
      %v1467 = vsel %vm365, %v1295, %v1400
      %v1468 = vsel %vm365, %v1296, %v1402
      %v1469 = vsel %vm368, %v1467, %v1406
      %v1470 = vsel %vm368, %v1468, %v1408
      %v1471 = vsel %vm371, %v1469, %v1414
      %v1472 = vsel %vm371, %v1470, %v1416
      %v1473 = vsel %vm374, %v1471, %v1426
      %v1474 = vsel %vm374, %v1472, %v1428
      %v1475 = vsel %vm377, %v1473, %v1437
      %v1476 = vsel %vm377, %v1474, %v1439
      %v1477 = vsel %vm380, %v1475, %v1445
      %v1478 = vsel %vm380, %v1476, %v1447
      %v1479 = vsel %vm383, %v1477, %v1457
      %v1480 = vsel %vm383, %v1478, %v1459
      %v1481 = vld [vmem:[%s1258] sm:$0xff]
      %v1482 = vld [vmem:[%s1258 + $0x8] sm:$0xff]
      %v1483 = vld [vmem:[%s1258 + $0x10] sm:$0x3]
      %v1484 = vld [vmem:[%s1261] sm:$0xff]
      %v1485 = vld [vmem:[%s1261 + $0x8] sm:$0xff]
      %v1486 = vld [vmem:[%s1261 + $0x10] sm:$0x3]
      %1487 = vrot.lane.b32.xlu0 %v1453, 16
      %v1488 = vpop.permute.xlu0 %1487
      %1489 = vrot.lane.b32.xlu0 %v1455, 16
      %v1490 = vpop.permute.xlu0 %1489
      %1493 = vrot.lane.b32.xlu0 %v1464, 32
      %v1494 = vpop.permute.xlu0 %1493
      %1495 = vrot.lane.b32.xlu0 %v1466, 32
      %v1496 = vpop.permute.xlu0 %1495
      %1501 = vrot.lane.b32.xlu0 %v1481, 48
      %v1502 = vpop.permute.xlu0 %1501
      %1503 = vrot.lane.b32.xlu0 %v1482, 48
      %v1504 = vpop.permute.xlu0 %1503
      %v1508 = vrot.slane %v1481, 1
      %v1509 = vrot.slane %v1482, 1
      %v1510 = vsel %vm285, %v1508, %v1509
      %v1511 = vrot.slane %v1483, 1
      %v1512 = vsel %vm285, %v1509, %v1511
      %1513 = vrot.lane.b32.xlu0 %v1510, 64
      %v1514 = vpop.permute.xlu0 %1513
      %1515 = vrot.lane.b32.xlu0 %v1512, 64
      %v1516 = vpop.permute.xlu0 %1515
      %v1519 = vrot.slane %v1481, 2
      %v1520 = vrot.slane %v1482, 2
      %v1521 = vsel %vm297, %v1519, %v1520
      %v1522 = vrot.slane %v1483, 2
      %v1523 = vsel %vm297, %v1520, %v1522
      %1524 = vrot.lane.b32.xlu0 %v1521, 80
      %v1525 = vpop.permute.xlu0 %1524
      %1526 = vrot.lane.b32.xlu0 %v1523, 80
      %v1527 = vpop.permute.xlu0 %1526
      %1532 = vrot.lane.b32.xlu0 %v1484, 96
      %v1533 = vpop.permute.xlu0 %1532
      %1534 = vrot.lane.b32.xlu0 %v1485, 96
      %v1535 = vpop.permute.xlu0 %1534
      %v1539 = vrot.slane %v1484, 1
      %v1540 = vrot.slane %v1485, 1
      %v1541 = vsel %vm285, %v1539, %v1540
      %v1542 = vrot.slane %v1486, 1
      %v1543 = vsel %vm285, %v1540, %v1542
      %1544 = vrot.lane.b32.xlu0 %v1541, 112
      %v1545 = vpop.permute.xlu0 %1544
      %1546 = vrot.lane.b32.xlu0 %v1543, 112
      %v1547 = vpop.permute.xlu0 %1546
      %v1550 = vrot.slane %v1484, 2
      %v1551 = vrot.slane %v1485, 2
      %v1552 = vsel %vm297, %v1550, %v1551
      %v1553 = vrot.slane %v1486, 2
      %v1554 = vsel %vm297, %v1551, %v1553
      %v1555 = vsel %vm365, %v1396, %v1488
      %v1556 = vsel %vm365, %v1397, %v1490
      %v1557 = vsel %vm368, %v1555, %v1494
      %v1558 = vsel %vm368, %v1556, %v1496
      %v1559 = vsel %vm371, %v1557, %v1502
      %v1560 = vsel %vm371, %v1558, %v1504
      %v1561 = vsel %vm374, %v1559, %v1514
      %v1562 = vsel %vm374, %v1560, %v1516
      %v1563 = vsel %vm377, %v1561, %v1525
      %v1564 = vsel %vm377, %v1562, %v1527
      %v1565 = vsel %vm380, %v1563, %v1533
      %v1566 = vsel %vm380, %v1564, %v1535
      %v1567 = vsel %vm383, %v1565, %v1545
      %v1568 = vsel %vm383, %v1566, %v1547
      %v1569 = vld [vmem:[%s1264] sm:$0xff]
      %v1570 = vld [vmem:[%s1264 + $0x8] sm:$0xff]
      %v1571 = vld [vmem:[%s1264 + $0x10] sm:$0x3]
      %v1572 = vld [vmem:[%s1267] sm:$0xff]
      %v1573 = vld [vmem:[%s1267 + $0x8] sm:$0xff]
      %v1574 = vld [vmem:[%s1267 + $0x10] sm:$0x3]
      %1575 = vrot.lane.b32.xlu0 %v1541, 16
      %v1576 = vpop.permute.xlu0 %1575
      %1577 = vrot.lane.b32.xlu0 %v1543, 16
      %v1578 = vpop.permute.xlu0 %1577
      %1581 = vrot.lane.b32.xlu0 %v1552, 32
      %v1582 = vpop.permute.xlu0 %1581
      %1583 = vrot.lane.b32.xlu0 %v1554, 32
      %v1584 = vpop.permute.xlu0 %1583
      %1589 = vrot.lane.b32.xlu0 %v1569, 48
      %v1590 = vpop.permute.xlu0 %1589
      %1591 = vrot.lane.b32.xlu0 %v1570, 48
      %v1592 = vpop.permute.xlu0 %1591
      %v1596 = vrot.slane %v1569, 1
      %v1597 = vrot.slane %v1570, 1
      %v1598 = vsel %vm285, %v1596, %v1597
      %v1599 = vrot.slane %v1571, 1
      %v1600 = vsel %vm285, %v1597, %v1599
      %1601 = vrot.lane.b32.xlu0 %v1598, 64
      %v1602 = vpop.permute.xlu0 %1601
      %1603 = vrot.lane.b32.xlu0 %v1600, 64
      %v1604 = vpop.permute.xlu0 %1603
      %v1607 = vrot.slane %v1569, 2
      %v1608 = vrot.slane %v1570, 2
      %v1609 = vsel %vm297, %v1607, %v1608
      %v1610 = vrot.slane %v1571, 2
      %v1611 = vsel %vm297, %v1608, %v1610
      %1612 = vrot.lane.b32.xlu0 %v1609, 80
      %v1613 = vpop.permute.xlu0 %1612
      %1614 = vrot.lane.b32.xlu0 %v1611, 80
      %v1615 = vpop.permute.xlu0 %1614
      %1620 = vrot.lane.b32.xlu0 %v1572, 96
      %v1621 = vpop.permute.xlu0 %1620
      %1622 = vrot.lane.b32.xlu0 %v1573, 96
      %v1623 = vpop.permute.xlu0 %1622
      %v1627 = vrot.slane %v1572, 1
      %v1628 = vrot.slane %v1573, 1
      %v1629 = vsel %vm285, %v1627, %v1628
      %v1630 = vrot.slane %v1574, 1
      %v1631 = vsel %vm285, %v1628, %v1630
      %1632 = vrot.lane.b32.xlu0 %v1629, 112
      %v1633 = vpop.permute.xlu0 %1632
      %1634 = vrot.lane.b32.xlu0 %v1631, 112
      %v1635 = vpop.permute.xlu0 %1634
      %v1638 = vrot.slane %v1572, 2
      %v1639 = vrot.slane %v1573, 2
      %v1640 = vsel %vm297, %v1638, %v1639
      %v1641 = vrot.slane %v1574, 2
      %v1642 = vsel %vm297, %v1639, %v1641
      %v1643 = vsel %vm365, %v1484, %v1576
      %v1644 = vsel %vm365, %v1485, %v1578
      %v1645 = vsel %vm368, %v1643, %v1582
      %v1646 = vsel %vm368, %v1644, %v1584
      %v1647 = vsel %vm371, %v1645, %v1590
      %v1648 = vsel %vm371, %v1646, %v1592
      %v1649 = vsel %vm374, %v1647, %v1602
      %v1650 = vsel %vm374, %v1648, %v1604
      %v1651 = vsel %vm377, %v1649, %v1613
      %v1652 = vsel %vm377, %v1650, %v1615
      %v1653 = vsel %vm380, %v1651, %v1621
      %v1654 = vsel %vm380, %v1652, %v1623
      %v1655 = vsel %vm383, %v1653, %v1633
      %v1656 = vsel %vm383, %v1654, %v1635
      %v1658 = vlaneseq
      %v1659 = vshrl.u32 %v1658, 7
      %v1660 = vsub.s32 0, %v1659
      %v1661 = vrot.slane %v1288, %v1660
      %v1663 = vsel %vm365, %v1376, 0
      %v1665 = vsel %vm365, %v1378, 0
      %v1667 = vsel %vm365, %v1464, 0
      %v1669 = vsel %vm365, %v1466, 0
      %v1671 = vsel %vm365, %v1552, 0
      %v1673 = vsel %vm365, %v1554, 0
      %v1675 = vsel %vm365, %v1640, 0
      %v1677 = vsel %vm365, %v1642, 0
      %1679 = vmatprep.subr.mxu0 0.0
      %1680 = vmatpush1.msra.mxu0 %v1270
      %1681 = vmatprep.subr.mxu0 0.0
      %1682 = vmatpush1.msra.mxu0 %v1271
      %1683 = vmatprep.subr.mxu0 0.0
      %1684 = vmatpush1.msra.mxu0 %v1272
      %1685 = vmatprep.subr.mxu0 0.0
      %1686 = vmatpush1.msra.mxu0 %v1273
      %1687 = vmatprep.subr.mxu0 0.0
      %1688 = vmatpush1.msra.mxu0 %v1274
      %1689 = vmatprep.subr.mxu0 0.0
      %1690 = vmatpush1.msra.mxu0 %v1275
      %1691 = vmatprep.subr.mxu0 0.0
      %1692 = vmatpush1.msra.mxu0 %v1276
      %1693 = vmatprep.subr.mxu0 0.0
      %1694 = vmatpush1.msra.mxu0 %v1277
      %1695 = vmatprep.subr.mxu0 0.0
      %1696 = vmatpush1.msra.mxu0 %v1278
      %1697 = vmatprep.subr.mxu0 0.0
      %1698 = vmatpush1.msra.mxu0 %v1279
      %1699 = vmatprep.subr.mxu0 0.0
      %1700 = vmatpush1.msra.mxu0 %v1280
      %1701 = vmatprep.subr.mxu0 0.0
      %1702 = vmatpush1.msra.mxu0 %v1281
      %1703 = vmatprep.subr.mxu0 0.0
      %1704 = vmatpush1.msra.mxu0 %v1282
      %1705 = vmatprep.subr.mxu0 0.0
      %1706 = vmatpush1.msra.mxu0 %v1283
      %1707 = vmatprep.subr.mxu0 0.0
      %1708 = vmatpush1.msra.mxu0 %v1284
      %1709 = vmatprep.subr.mxu0 0.0
      %1710 = vmatpush1.msra.mxu0 %v1285
      %1711 = vmatprep.subr.mxu0 0.0
      %1712 = vmatpush1.msra.mxu0 %v1286
      %1713 = vmatprep.subr.mxu0 0.0
      %1714 = vmatpush1.msra.mxu0 %v1287
      %1715 = vmatprep.subr.mxu0 0.0
      %1716 = vmatpush1.msra.mxu0 0.0
      %1717 = vmatprep.subr.mxu0 0.0
      %1718 = vmatpush1.msra.mxu0 0.0
      %1719 = vmatprep.subr.mxu0 0.0
      %1720 = vmatpush1.msra.mxu0 0.0
      %1721 = vmatprep.subr.mxu0 0.0
      %1722 = vmatpush1.msra.mxu0 0.0
      %1723 = vmatprep.subr.mxu0 0.0
      %1724 = vmatpush1.msra.mxu0 0.0
      %1725 = vmatprep.subr.mxu0 0.0
      %1726 = vmatpush1.msra.mxu0 0.0
      %1727 = vmatprep.subr.mxu0 0.0
      %1728 = vmatpush1.msra.mxu0 0.0
      %1729 = vmatprep.subr.mxu0 0.0
      %1730 = vmatpush1.msra.mxu0 0.0
      %1731 = vmatprep.subr.mxu0 0.0
      %1732 = vmatpush1.msra.mxu0 0.0
      %1733 = vmatprep.subr.mxu0 0.0
      %1734 = vmatpush1.msra.mxu0 0.0
      %1735 = vmatprep.subr.mxu0 0.0
      %1736 = vmatpush1.msra.mxu0 0.0
      %1737 = vmatprep.subr.mxu0 0.0
      %1738 = vmatpush1.msra.mxu0 0.0
      %1739 = vmatprep.subr.mxu0 0.0
      %1740 = vmatpush1.msra.mxu0 0.0
      %1741 = vmatprep.subr.mxu0 0.0
      %1742 = vmatpush1.msra.mxu0 0.0
      %1743 = vmatprep.mubr.f32.mxu0 %v1663
      %1744 = vmatmul.mubr.f32.gmra.mrb[0].mxu0 %v1391
      %v1745 = vpop.f32.mrb[0].mxu0
      %v1746 = vadd.f32 %v1661, %v1745
      %v1747 = vpop.f32.mrb[0].mxu0
      %1748 = vmatprep.mubr.f32.mxu0 %v1665
      %1749 = vmatmul.mubr.f32.gmra.mrb[0].mxu0 %v1392
      %v1750 = vpop.f32.mrb[0].mxu0
      %v1751 = vadd.f32 %v1661, %v1750
      %v1752 = vpop.f32.mrb[0].mxu0
      %1753 = vmatprep.mubr.f32.mxu0 %v1667
      %1754 = vmatmul.mubr.f32.gmra.mrb[0].mxu0 %v1479
      %v1755 = vpop.f32.mrb[0].mxu0
      %v1756 = vadd.f32 %v1661, %v1755
      %v1757 = vpop.f32.mrb[0].mxu0
      %1758 = vmatprep.mubr.f32.mxu0 %v1669
      %1759 = vmatmul.mubr.f32.gmra.mrb[0].mxu0 %v1480
      %v1760 = vpop.f32.mrb[0].mxu0
      %v1761 = vadd.f32 %v1661, %v1760
      %v1762 = vpop.f32.mrb[0].mxu0
      %1763 = vmatprep.mubr.f32.mxu0 %v1671
      %1764 = vmatmul.mubr.f32.gmra.mrb[0].mxu0 %v1567
      %v1765 = vpop.f32.mrb[0].mxu0
      %v1766 = vadd.f32 %v1661, %v1765
      %v1767 = vpop.f32.mrb[0].mxu0
      %1768 = vmatprep.mubr.f32.mxu0 %v1673
      %1769 = vmatmul.mubr.f32.gmra.mrb[0].mxu0 %v1568
      %v1770 = vpop.f32.mrb[0].mxu0
      %v1771 = vadd.f32 %v1661, %v1770
      %v1772 = vpop.f32.mrb[0].mxu0
      %1773 = vmatprep.mubr.f32.mxu0 %v1675
      %1774 = vmatmul.mubr.f32.gmra.mrb[0].mxu0 %v1655
      %v1775 = vpop.f32.mrb[0].mxu0
      %v1776 = vadd.f32 %v1661, %v1775
      %v1777 = vpop.f32.mrb[0].mxu0
      %1778 = vmatprep.mubr.f32.mxu0 %v1677
      %1779 = vmatmul.mubr.f32.gmra.mrb[0].mxu0 %v1656
      %v1780 = vpop.f32.mrb[0].mxu0
      %v1781 = vadd.f32 %v1661, %v1780
      %v1782 = vpop.f32.mrb[0].mxu0
      %1783 = vdwg.mxu0
      %v1784 = vmax.f32 %v1746, 0.0
      %v1785 = vmax.f32 %v1751, 0.0
      %v1786 = vmax.f32 %v1756, 0.0
      %v1787 = vmax.f32 %v1761, 0.0
      %v1788 = vmax.f32 %v1766, 0.0
      %v1789 = vmax.f32 %v1771, 0.0
      %v1790 = vmax.f32 %v1776, 0.0
      %v1791 = vmax.f32 %v1781, 0.0
      %1794 = vrot.lane.b32.xlu0 %v1786, 16
      %v1795 = vpop.permute.xlu0 %1794
      %1796 = vrot.lane.b32.xlu0 %v1787, 16
      %v1797 = vpop.permute.xlu0 %1796
      %1802 = vrot.lane.b32.xlu0 %v1788, 32
      %v1803 = vpop.permute.xlu0 %1802
      %1804 = vrot.lane.b32.xlu0 %v1789, 32
      %v1805 = vpop.permute.xlu0 %1804
      %1810 = vrot.lane.b32.xlu0 %v1790, 48
      %v1811 = vpop.permute.xlu0 %1810
      %1812 = vrot.lane.b32.xlu0 %v1791, 48
      %v1813 = vpop.permute.xlu0 %1812
      %v1816 = vsel %vm365, %v1784, %v1795
      %v1817 = vsel %vm365, %v1785, %v1797
      %v1818 = vsel %vm368, %v1816, %v1803
      %v1819 = vsel %vm368, %v1817, %v1805
      %v1820 = vsel %vm371, %v1818, %v1811
      %v1821 = vsel %vm371, %v1819, %v1813
      %v1822 = vld [vmem:[%s5] sm:$0xff]
      %v1823 = vld [vmem:[%s5 + $0x8] sm:$0xff]
      %v1824 = vld [vmem:[%s5 + $0x10] sm:$0xff]
      %v1825 = vld [vmem:[%s5 + $0x18] sm:$0xff]
      %v1826 = vld [vmem:[%s5 + $0x20] sm:$0xff]
      %v1827 = vld [vmem:[%s5 + $0x28] sm:$0xff]
      %v1828 = vld [vmem:[%s5 + $0x30] sm:$0xff]
      %v1829 = vld [vmem:[%s5 + $0x38] sm:$0xff]
      %v1831 = vsel %vm374, %v1820, 0
      %v1834 = vsel %vm374, %v1821, 0
      %1836 = vmatprep.subr.mxu0 0.0
      %1837 = vmatpush1.msra.mxu0 %v1822
      %1838 = vmatprep.subr.mxu0 0.0
      %1839 = vmatpush1.msra.mxu0 %v1823
      %1840 = vmatprep.subr.mxu0 0.0
      %1841 = vmatpush1.msra.mxu0 %v1824
      %1842 = vmatprep.subr.mxu0 0.0
      %1843 = vmatpush1.msra.mxu0 %v1825
      %1844 = vmatprep.subr.mxu0 0.0
      %1845 = vmatpush1.msra.mxu0 %v1826
      %1846 = vmatprep.subr.mxu0 0.0
      %1847 = vmatpush1.msra.mxu0 %v1827
      %1848 = vmatprep.subr.mxu0 0.0
      %1849 = vmatpush1.msra.mxu0 %v1828
      %1850 = vmatprep.subr.mxu0 0.0
      %1851 = vmatpush1.msra.mxu0 %v1829
      %1852 = vmatprep.subr.mxu0 0.0
      %1853 = vmatpush1.msra.mxu0 0.0
      %1854 = vmatprep.subr.mxu0 0.0
      %1855 = vmatpush1.msra.mxu0 0.0
      %1856 = vmatprep.subr.mxu0 0.0
      %1857 = vmatpush1.msra.mxu0 0.0
      %1858 = vmatprep.subr.mxu0 0.0
      %1859 = vmatpush1.msra.mxu0 0.0
      %1860 = vmatprep.subr.mxu0 0.0
      %1861 = vmatpush1.msra.mxu0 0.0
      %1862 = vmatprep.subr.mxu0 0.0
      %1863 = vmatpush1.msra.mxu0 0.0
      %1864 = vmatprep.subr.mxu0 0.0
      %1865 = vmatpush1.msra.mxu0 0.0
      %1866 = vmatprep.subr.mxu0 0.0
      %1867 = vmatpush1.msra.mxu0 0.0
      %1868 = vmatprep.subr.mxu0 0.0
      %1869 = vmatpush1.msra.mxu0 0.0
      %1870 = vmatprep.subr.mxu0 0.0
      %1871 = vmatpush1.msra.mxu0 0.0
      %1872 = vmatprep.subr.mxu0 0.0
      %1873 = vmatpush1.msra.mxu0 0.0
      %1874 = vmatprep.subr.mxu0 0.0
      %1875 = vmatpush1.msra.mxu0 0.0
      %1876 = vmatprep.subr.mxu0 0.0
      %1877 = vmatpush1.msra.mxu0 0.0
      %1878 = vmatprep.subr.mxu0 0.0
      %1879 = vmatpush1.msra.mxu0 0.0
      %1880 = vmatprep.subr.mxu0 0.0
      %1881 = vmatpush1.msra.mxu0 0.0
      %1882 = vmatprep.subr.mxu0 0.0
      %1883 = vmatpush1.msra.mxu0 0.0
      %1884 = vmatprep.subr.mxu0 0.0
      %1885 = vmatpush1.msra.mxu0 0.0
      %1886 = vmatprep.subr.mxu0 0.0
      %1887 = vmatpush1.msra.mxu0 0.0
      %1888 = vmatprep.subr.mxu0 0.0
      %1889 = vmatpush1.msra.mxu0 0.0
      %1890 = vmatprep.subr.mxu0 0.0
      %1891 = vmatpush1.msra.mxu0 0.0
      %1892 = vmatprep.subr.mxu0 0.0
      %1893 = vmatpush1.msra.mxu0 0.0
      %1894 = vmatprep.subr.mxu0 0.0
      %1895 = vmatpush1.msra.mxu0 0.0
      %1896 = vmatprep.subr.mxu0 0.0
      %1897 = vmatpush1.msra.mxu0 0.0
      %1898 = vmatprep.subr.mxu0 0.0
      %1899 = vmatpush1.msra.mxu0 0.0
      %1900 = vmatprep.mubr.f32.mxu0 0.0
      %1901 = vmatmul.mubr.f32.gmra.mrb[0].mxu0 %v1831
      %v1902 = vpop.f32.mrb[0].mxu0
      %v1903 = vadd.f32 0.0, %v1902
      %v1904 = vpop.f32.mrb[0].mxu0
      %1905 = vmatprep.mubr.f32.mxu0 0.0
      %1906 = vmatmul.mubr.f32.gmra.mrb[0].mxu0 %v1834
      %v1907 = vpop.f32.mrb[0].mxu0
      %v1908 = vadd.f32 0.0, %v1907
      %v1909 = vpop.f32.mrb[0].mxu0
      %1910 = vdwg.mxu0
      %1911 = vst.msk [vmem:[%s251] sm:$0xff] %vm365, %v1903
      %1912 = vst.msk [vmem:[%s251 + $0x8] sm:$0xff] %vm365, %v1908
      %p1913 = scmp.lt.s32.totalorder %s17, 1
      %s1914 = scalar_select %p1913, %s17, 1
      %s1915 = smul.addr %s1914, 2
      %s1916 = smul.addr %s1915, 8
      %s1917 = scalar_lea.vmem %s6, %s1916
      // Predicated region
      $region45: #{seqconvs_forward.1} parent=43 // pred_check
        %p1918 = pneg %p166
      $region46: #{seqconvs_forward.1} parent=43 // pred_check_branch
        %1920 = sbr.rel (%p1918) target = $region48
      $region47: #{seqconvs_forward.1} parent=43 // pred_region
        _
      $region48: #{seqconvs_forward.1} parent=43 // pred_fallthru
        _
    $region44: #{seqconvs_forward.1} parent=5 // pred_fallthru
      _
    %p1921 = scmp.le.s32.totalorder 2, %s12
    // Predicated region
    $region49: #{seqconvs_forward.1} parent=5 // pred_check
      %p1922 = pneg %p1921
    $region50: #{seqconvs_forward.1} parent=5 // pred_check_branch
      %1924 = sbr.rel (%p1922) target = $region52
    $region51: #{seqconvs_forward.1} parent=5 // pred_region
      %s1925 = ssub.s32 %s12, 2
      // Predicated region
      $region53: #{seqconvs_forward.1} parent=51 // pred_check
        %p1926 = pneg %p172
      $region54: #{seqconvs_forward.1} parent=51 // pred_check_branch
        %1928 = sbr.rel (%p1926) target = $region56
      $region55: #{seqconvs_forward.1} parent=51 // pred_region
        %p1929 = scmp.lt.s32.totalorder %s18, 1
        %s1930 = scalar_select %p1929, %s18, 1
        %s1931 = smul.addr %s1930, 2
        %s1932 = smul.addr %s1931, 8
        %s1933 = scalar_lea.vmem %s6, %s1932
      $region56: #{seqconvs_forward.1} parent=51 // pred_fallthru
        _
    $region52: #{seqconvs_forward.1} parent=5 // pred_fallthru
      _
  $region6: #{seqconvs_forward.1} parent=0 // loop_footer
    %s16 = sadd.s32 1, %s12
  $region7: #{seqconvs_forward.1} parent=0 // loop_footer_branch
    %11 = sbr.rel target = $region3
  $region8: #{seqconvs_forward.1} parent=0 // loop_exit
    _

</llo_original>
